<compile_context>
chip_gen: v6e
topology: v6e:2x2x1
jax: 0.10.0
libtpu: 0.0.40
codegen_flags: <defaults>
</compile_context>

<pallas_src>
import jax
import jax.numpy as jnp
from jax.experimental import pallas as pl
from jax.experimental.pallas import tpu as pltpu


def _cdiv(a, b):
  return (a + b - 1) // b


def _round_up(x, m):
  return (x + m - 1) // m * m


def _mm_classifier_kernel(text_ref, img_ref,
                          wt_ref, wi_ref, w1_ref, w2_ref, w3_ref, w4_ref,
                          bias_ref, out_ref, cat_ref):
  """Forward pass for one batch tile; all weights resident in VMEM."""
  H = wt_ref.shape[1]           # hidden_dim (static)
  cdt = wt_ref.dtype            # MXU input dtype (bf16)

  # Packed biases: [bt(H) | bi(H) | b1(2H) | b2(2H) | b3(H) | b4(128)]
  bt = bias_ref[:, 0:H]
  bi = bias_ref[:, H:2 * H]
  b1 = bias_ref[:, 2 * H:4 * H]
  b2 = bias_ref[:, 4 * H:6 * H]
  b3 = bias_ref[:, 6 * H:7 * H]
  b4 = bias_ref[:, 7 * H:]

  # Projections (BN0 of the concat is pre-folded into wt/bt and wi/bi),
  # followed by the DeepClassifier's leading ReLU (Dropout = identity).
  t = jnp.dot(text_ref[...].astype(cdt), wt_ref[...],
              preferred_element_type=jnp.float32) + bt
  i = jnp.dot(img_ref[...].astype(cdt), wi_ref[...],
              preferred_element_type=jnp.float32) + bi

  # Lane-concat into a (tb, 2H) bf16 scratch (two 128-aligned vst's) so block 1
  # is ONE K=2H matmul -> full 256-deep MXU utilization on v6e/v7x.
  cat_ref[:, 0:H] = jnp.maximum(t, 0.0).astype(cdt)
  cat_ref[:, H:] = jnp.maximum(i, 0.0).astype(cdt)

  # Block 1: Linear(2H -> 2H) (+ folded BN1) -> ReLU
  h = jnp.dot(cat_ref[...], w1_ref[...], preferred_element_type=jnp.float32)
  h = jnp.maximum(h + b1, 0.0)

  # Block 2: Linear(2H -> 2H) (+ folded BN2) -> ReLU
  h = jnp.dot(h.astype(cdt), w2_ref[...], preferred_element_type=jnp.float32)
  h = jnp.maximum(h + b2, 0.0)

  # Block 3: Linear(2H -> H) (+ folded BN3) -> ReLU
  h = jnp.dot(h.astype(cdt), w3_ref[...], preferred_element_type=jnp.float32)
  h = jnp.maximum(h + b3, 0.0)

  # Head: Linear(H -> num_classes), lane-padded to 128 columns, bf16 store.
  out = jnp.dot(h.astype(cdt), w4_ref[...],
                preferred_element_type=jnp.float32) + b4
  out_ref[...] = out.astype(out_ref.dtype)


def _choose_batch_tile(B, tile_b, min_steps=2):
  """Batch tile: multiple of 8, >= min_steps grid steps when B allows (so both
  v7x TensorCores get work), and the smallest tile that keeps that step count
  (minimizes padded rows)."""
  tb = min(tile_b, _round_up(B, 8))
  if B >= 8 * min_steps:
    tb = min(tb, max(8, _round_up(_cdiv(B, min_steps), 8)))
  steps = _cdiv(B, tb)
  tb = max(8, _round_up(_cdiv(B, steps), 8))
  return tb


def _vmem_limit_bytes(tb, Td, Id, H, npad, blen, in_itemsize):
  """Resident weights (single-buffered) + double-buffered streams + headroom.
  Never lowered below the 32 MiB default; capped at 100 MiB."""
  wbytes = (Td * H + Id * H + 4 * H * H + 4 * H * H + 2 * H * H + H * npad) * 2
  streams = 2 * tb * (Td + Id) * in_itemsize      # double-buffered input tiles
  outs = 2 * tb * npad * 2                        # double-buffered bf16 output
  scratch = tb * 2 * H * 2                        # lane-concat scratch (bf16)
  biases = 8 * blen * 4                           # sublane-padded packed biases
  est = int((wbytes + streams + outs + scratch + biases) * 1.5) + (2 << 20)
  return min(100 << 20, max(32 << 20, est))


def multimodal_classifier_forward(text_emb, image_emb, kp, *, tile_b=512):
  """Calls the Pallas kernel with a 1-D batch grid; weights stay resident."""
  B, Td = text_emb.shape
  Id = image_emb.shape[1]
  H = kp["wt"].shape[1]
  npad = kp["w4"].shape[1]
  nc = kp["num_classes"]
  blen = kp["biases"].shape[1]

  # Batch tiling (sublane multiple of 8, >=2 steps when possible); pad batch.
  tb = _choose_batch_tile(B, tile_b)
  Bp = _round_up(B, tb)
  if Bp != B:
    text_emb = jnp.pad(text_emb, ((0, Bp - B), (0, 0)))
    image_emb = jnp.pad(image_emb, ((0, Bp - B), (0, 0)))

  resident = lambda i: (0, 0)        # weights/biases: same block every tile
  single = pl.Buffered(1)            # constant index_map -> one VMEM buffer

  flops = 2 * Bp * (Td * H + Id * H + 4 * H * H + 4 * H * H + 2 * H * H
                    + H * npad)
  bytes_accessed = (Bp * (Td + Id) * text_emb.dtype.itemsize
                    + (Td * H + Id * H + 8 * H * H + 2 * H * H + H * npad) * 2
                    + blen * 4 + Bp * npad * 2)

  # TODO(synk): for hidden_dim large enough that resident w1/w2 exceed ~60% of
  # per-core VMEM (hits v7x's 64 MiB first), add a K-tiled "arbitrary" grid
  # axis (f32 accumulator + pl.when init/finalize) or stream the weights with
  # pltpu.emit_pipeline; not needed at these sizes.
  out = pl.pallas_call(
      _mm_classifier_kernel,
      out_shape=jax.ShapeDtypeStruct((Bp, npad), jnp.bfloat16),
      grid=(Bp // tb,),
      in_specs=[
          pl.BlockSpec((tb, Td), lambda i: (i, 0)),                  # text
          pl.BlockSpec((tb, Id), lambda i: (i, 0)),                  # image
          pl.BlockSpec((Td, H), resident, pipeline_mode=single),     # wt
          pl.BlockSpec((Id, H), resident, pipeline_mode=single),     # wi
          pl.BlockSpec((2 * H, 2 * H), resident, pipeline_mode=single),  # w1
          pl.BlockSpec((2 * H, 2 * H), resident, pipeline_mode=single),  # w2
          pl.BlockSpec((2 * H, H), resident, pipeline_mode=single),      # w3
          pl.BlockSpec((H, npad), resident, pipeline_mode=single),       # w4
          pl.BlockSpec((1, blen), resident, pipeline_mode=single),   # biases
      ],
      out_specs=pl.BlockSpec((tb, npad), lambda i: (i, 0)),
      scratch_shapes=[pltpu.VMEM((tb, 2 * H), kp["wt"].dtype)],
      compiler_params=pltpu.CompilerParams(
          dimension_semantics=("parallel",),
          vmem_limit_bytes=_vmem_limit_bytes(
              tb, Td, Id, H, npad, blen, text_emb.dtype.itemsize),
      ),
      cost_estimate=pl.CostEstimate(
          flops=int(flops), transcendentals=0,
          bytes_accessed=int(bytes_accessed)),
  )(text_emb, image_emb, kp["wt"], kp["wi"], kp["w1"], kp["w2"], kp["w3"],
    kp["w4"], kp["biases"])

  return out[:B, :nc].astype(jnp.float32)


# ---------------------------------------------------------------------------
# Parameter construction: raw (PyTorch-like, f32, unfolded BN) and folded
# (kernel-ready: BN folded into linears, bf16 weights, packed biases).
# ---------------------------------------------------------------------------

def init_raw_params(key, text_dim, image_dim, hidden_dim, num_classes):
  H, H2 = hidden_dim, 2 * hidden_dim
  ks = iter(jax.random.split(key, 40))

  def lin(fi, fo):
    w = jax.random.normal(next(ks), (fi, fo), jnp.float32) / jnp.sqrt(fi)
    b = 0.01 * jax.random.normal(next(ks), (fo,), jnp.float32)
    return w, b

  def bn(f):
    g = 1.0 + 0.1 * jax.random.normal(next(ks), (f,), jnp.float32)
    b = 0.1 * jax.random.normal(next(ks), (f,), jnp.float32)
    m = 0.1 * jax.random.normal(next(ks), (f,), jnp.float32)
    v = jnp.abs(1.0 + 0.1 * jax.random.normal(next(ks), (f,), jnp.float32))
    return (g, b, m, v)

  wt, bt = lin(text_dim, H)
  wi, bi = lin(image_dim, H)
  bn0 = bn(H2)
  w1, b1 = lin(H2, H2)
  bn1 = bn(H2)
  w2, b2 = lin(H2, H2)
  bn2 = bn(H2)
  w3, b3 = lin(H2, H)
  bn3 = bn(H)
  w4, b4 = lin(H, num_classes)
  return dict(wt=wt, bt=bt, wi=wi, bi=bi, bn0=bn0,
              w1=w1, b1=b1, bn1=bn1, w2=w2, b2=b2, bn2=bn2,
              w3=w3, b3=b3, bn3=bn3, w4=w4, b4=b4)


def fold_params(p, eps=1e-5, weight_dtype=jnp.bfloat16, lane=128):
  """Fold BN into linears, pad the head to 128 lanes, pack biases.

  Note: hidden_dim multiples of 256 are preferred on v6e/v7x (256-deep MXU);
  128-multiples are required for the lane-aligned bias packing below.
  """
  H = p["wt"].shape[1]
  assert H % lane == 0, "hidden_dim must be a multiple of 128 for lane-aligned packing"

  def scale_shift(g, b, m, v):
    s = g / jnp.sqrt(v + eps)
    return s, b - m * s

  s0, sh0 = scale_shift(*p["bn0"])   # (2H,) - applies to cat([t, i])
  s1, sh1 = scale_shift(*p["bn1"])
  s2, sh2 = scale_shift(*p["bn2"])
  s3, sh3 = scale_shift(*p["bn3"])

  # BN0 folds into the two projection layers (per-output-column scale).
  wt = p["wt"] * s0[:H][None, :]
  bt = p["bt"] * s0[:H] + sh0[:H]
  wi = p["wi"] * s0[H:][None, :]
  bi = p["bi"] * s0[H:] + sh0[H:]
  # BN1/2/3 fold into Linear1/2/3.
  w1 = p["w1"] * s1[None, :]
  b1 = p["b1"] * s1 + sh1
  w2 = p["w2"] * s2[None, :]
  b2 = p["b2"] * s2 + sh2
  w3 = p["w3"] * s3[None, :]
  b3 = p["b3"] * s3 + sh3

  # Head padded to a lane-dense 128-wide output.
  nc = p["w4"].shape[1]
  npad = max(lane, _round_up(nc, lane))
  w4 = jnp.zeros((H, npad), jnp.float32).at[:, :nc].set(p["w4"])
  b4 = jnp.zeros((npad,), jnp.float32).at[:nc].set(p["b4"])

  biases = jnp.concatenate([bt, bi, b1, b2, b3, b4])[None, :].astype(jnp.float32)

  return dict(
      wt=wt.astype(weight_dtype), wi=wi.astype(weight_dtype),
      w1=w1.astype(weight_dtype), w2=w2.astype(weight_dtype),
      w3=w3.astype(weight_dtype), w4=w4.astype(weight_dtype),
      biases=biases, num_classes=nc)


def reference_forward(text_emb, image_emb, p, eps=1e-5):
  """Plain-JAX f32 reference mirroring the PyTorch forward (eval mode)."""
  def bn(x, stats):
    g, b, m, v = stats
    return (x - m) / jnp.sqrt(v + eps) * g + b

  t = text_emb @ p["wt"] + p["bt"]
  i = image_emb @ p["wi"] + p["bi"]
  x = jnp.concatenate([t, i], axis=1)
  h = jnp.maximum(bn(x, p["bn0"]), 0.0)
  h = jnp.maximum(bn(h @ p["w1"] + p["b1"], p["bn1"]), 0.0)
  h = jnp.maximum(bn(h @ p["w2"] + p["b2"], p["bn2"]), 0.0)
  h = jnp.maximum(bn(h @ p["w3"] + p["b3"], p["bn3"]), 0.0)
  return h @ p["w4"] + p["b4"]


if __name__ == "__main__":
  # Small, tile-friendly shapes consistent with the module's structure.
  # B=16 exercises a 2-step batch grid (v7x megacore path + resident weights
  # surviving across grid steps with a single buffer).
  B = 16
  TEXT_DIM = 256
  IMAGE_DIM = 256
  HIDDEN_DIM = 128     # hidden_dim*2 = 256; multiple of 128 for lane alignment
  NUM_CLASSES = 3

  root = jax.random.PRNGKey(0)
  k_text, k_img, k_params = jax.random.split(root, 3)

  text_emb = jax.random.normal(k_text, (B, TEXT_DIM), jnp.float32)
  image_emb = jax.random.normal(k_img, (B, IMAGE_DIM), jnp.float32)

  raw_params = init_raw_params(k_params, TEXT_DIM, IMAGE_DIM, HIDDEN_DIM,
                               NUM_CLASSES)
  kernel_params = fold_params(raw_params)

  out = multimodal_classifier_forward(text_emb, image_emb, kernel_params)
  out = jax.block_until_ready(out)

  ref = reference_forward(text_emb, image_emb, raw_params)
  assert out.shape == (B, NUM_CLASSES), out.shape
  # bf16 weights + bf16 MXU inputs + bf16 output vs. f32 reference -> loose
  # tolerance (intentional precision trade documented in the review).
  assert jnp.allclose(out, ref, atol=1e-1, rtol=1e-1), float(
      jnp.max(jnp.abs(out - ref)))

  # TODO(synk): training-mode BatchNorm (batch statistics) and Dropout RNG are
  # intentionally not modeled; this kernel implements eval-mode semantics.
  print("KERNEL_OK")
</pallas_src>

<mosaic_0001>
module attributes {stable_mosaic.version = 11 : i64} {
  func.func @_mm_classifier_kernel(%arg0: i32, %arg1: memref<8x256xf32, #tpu.memory_space<vmem>>, %arg2: memref<8x256xf32, #tpu.memory_space<vmem>>, %arg3: memref<256x128xbf16, #tpu.memory_space<vmem>>, %arg4: memref<256x128xbf16, #tpu.memory_space<vmem>>, %arg5: memref<256x256xbf16, #tpu.memory_space<vmem>>, %arg6: memref<256x256xbf16, #tpu.memory_space<vmem>>, %arg7: memref<256x128xbf16, #tpu.memory_space<vmem>>, %arg8: memref<128x128xbf16, #tpu.memory_space<vmem>>, %arg9: memref<1x1024xf32, #tpu.memory_space<vmem>>, %arg10: memref<8x128xbf16, #tpu.memory_space<vmem>>, %arg11: memref<8x256xbf16, #tpu.memory_space<vmem>>) attributes {dimension_semantics = [#tpu.dimension_semantics<parallel>], iteration_bounds = array<i64: 2>, scalar_prefetch = 0 : i64, scratch_operands = 1 : i64, tpu.core_type = #tpu.core_type<tc>, window_params = [{transform_indices = @transform_0, window_bounds = array<i64: 8, 256>}, {transform_indices = @transform_1, window_bounds = array<i64: 8, 256>}, {pipeline_mode = #tpu.pipeline_mode<synchronous>, transform_indices = @transform_2, window_bounds = array<i64: 256, 128>}, {pipeline_mode = #tpu.pipeline_mode<synchronous>, transform_indices = @transform_3, window_bounds = array<i64: 256, 128>}, {pipeline_mode = #tpu.pipeline_mode<synchronous>, transform_indices = @transform_4, window_bounds = array<i64: 256, 256>}, {pipeline_mode = #tpu.pipeline_mode<synchronous>, transform_indices = @transform_5, window_bounds = array<i64: 256, 256>}, {pipeline_mode = #tpu.pipeline_mode<synchronous>, transform_indices = @transform_6, window_bounds = array<i64: 256, 128>}, {pipeline_mode = #tpu.pipeline_mode<synchronous>, transform_indices = @transform_7, window_bounds = array<i64: 128, 128>}, {pipeline_mode = #tpu.pipeline_mode<synchronous>, transform_indices = @transform_8, window_bounds = array<i64: 1, 1024>}, {transform_indices = @transform_9, window_bounds = array<i64: 8, 128>}]} {
    %c0 = arith.constant 0 : index
    %c0_0 = arith.constant 0 : index
    %0 = vector.load %arg9[%c0, %c0_0] : memref<1x1024xf32, #tpu.memory_space<vmem>>, vector<1x128xf32>
    %c0_1 = arith.constant 0 : index
    %c128 = arith.constant 128 : index
    %1 = vector.load %arg9[%c0_1, %c128] : memref<1x1024xf32, #tpu.memory_space<vmem>>, vector<1x128xf32>
    %c0_2 = arith.constant 0 : index
    %c256 = arith.constant 256 : index
    %2 = vector.load %arg9[%c0_2, %c256] : memref<1x1024xf32, #tpu.memory_space<vmem>>, vector<1x256xf32>
    %c0_3 = arith.constant 0 : index
    %c512 = arith.constant 512 : index
    %3 = vector.load %arg9[%c0_3, %c512] : memref<1x1024xf32, #tpu.memory_space<vmem>>, vector<1x256xf32>
    %c0_4 = arith.constant 0 : index
    %c768 = arith.constant 768 : index
    %4 = vector.load %arg9[%c0_4, %c768] : memref<1x1024xf32, #tpu.memory_space<vmem>>, vector<1x128xf32>
    %c0_5 = arith.constant 0 : index
    %c896 = arith.constant 896 : index
    %5 = vector.load %arg9[%c0_5, %c896] : memref<1x1024xf32, #tpu.memory_space<vmem>>, vector<1x128xf32>
    %c0_6 = arith.constant 0 : index
    %c0_7 = arith.constant 0 : index
    %6 = vector.load %arg1[%c0_6, %c0_7] : memref<8x256xf32, #tpu.memory_space<vmem>>, vector<8x256xf32>
    %7 = arith.truncf %6 : vector<8x256xf32> to vector<8x256xbf16>
    %c0_8 = arith.constant 0 : index
    %c0_9 = arith.constant 0 : index
    %8 = vector.load %arg3[%c0_8, %c0_9] : memref<256x128xbf16, #tpu.memory_space<vmem>>, vector<256x128xbf16>
    %cst = arith.constant dense<0.000000e+00> : vector<8x128xf32>
    %9 = tpu.matmul %7, %8, %cst {dimension_numbers = #tpu.dot_dimension_numbers<[1], [0], [0], [1], [0, 0, 1, 1], [], []>} : vector<8x256xbf16>, vector<256x128xbf16>, vector<8x128xf32> -> vector<8x128xf32>
    %10 = vector.broadcast %0 : vector<1x128xf32> to vector<8x128xf32>
    %11 = arith.addf %9, %10 : vector<8x128xf32>
    %c0_10 = arith.constant 0 : index
    %c0_11 = arith.constant 0 : index
    %12 = vector.load %arg2[%c0_10, %c0_11] : memref<8x256xf32, #tpu.memory_space<vmem>>, vector<8x256xf32>
    %13 = arith.truncf %12 : vector<8x256xf32> to vector<8x256xbf16>
    %c0_12 = arith.constant 0 : index
    %c0_13 = arith.constant 0 : index
    %14 = vector.load %arg4[%c0_12, %c0_13] : memref<256x128xbf16, #tpu.memory_space<vmem>>, vector<256x128xbf16>
    %cst_14 = arith.constant dense<0.000000e+00> : vector<8x128xf32>
    %15 = tpu.matmul %13, %14, %cst_14 {dimension_numbers = #tpu.dot_dimension_numbers<[1], [0], [0], [1], [0, 0, 1, 1], [], []>} : vector<8x256xbf16>, vector<256x128xbf16>, vector<8x128xf32> -> vector<8x128xf32>
    %16 = vector.broadcast %1 : vector<1x128xf32> to vector<8x128xf32>
    %17 = arith.addf %15, %16 : vector<8x128xf32>
    %cst_15 = arith.constant 0.000000e+00 : f32
    %18 = vector.broadcast %cst_15 : f32 to vector<8x128xf32>
    %19 = arith.maximumf %11, %18 : vector<8x128xf32>
    %20 = arith.truncf %19 : vector<8x128xf32> to vector<8x128xbf16>
    %c0_16 = arith.constant 0 : index
    %c0_17 = arith.constant 0 : index
    %21 = vector.load %arg11[%c0_16, %c0_17] : memref<8x256xbf16, #tpu.memory_space<vmem>>, vector<8x128xbf16>
    tpu.vector_store %arg11[%c0_16, %c0_17], %20 {strides = array<i32>} : memref<8x256xbf16, #tpu.memory_space<vmem>>, vector<8x128xbf16>,
    %cst_18 = arith.constant 0.000000e+00 : f32
    %22 = vector.broadcast %cst_18 : f32 to vector<8x128xf32>
    %23 = arith.maximumf %17, %22 : vector<8x128xf32>
    %24 = arith.truncf %23 : vector<8x128xf32> to vector<8x128xbf16>
    %c0_19 = arith.constant 0 : index
    %c128_20 = arith.constant 128 : index
    %25 = vector.load %arg11[%c0_19, %c128_20] : memref<8x256xbf16, #tpu.memory_space<vmem>>, vector<8x128xbf16>
    tpu.vector_store %arg11[%c0_19, %c128_20], %24 {strides = array<i32>} : memref<8x256xbf16, #tpu.memory_space<vmem>>, vector<8x128xbf16>,
    %c0_21 = arith.constant 0 : index
    %c0_22 = arith.constant 0 : index
    %26 = vector.load %arg11[%c0_21, %c0_22] : memref<8x256xbf16, #tpu.memory_space<vmem>>, vector<8x256xbf16>
    %c0_23 = arith.constant 0 : index
    %c0_24 = arith.constant 0 : index
    %27 = vector.load %arg5[%c0_23, %c0_24] : memref<256x256xbf16, #tpu.memory_space<vmem>>, vector<256x256xbf16>
    %cst_25 = arith.constant dense<0.000000e+00> : vector<8x256xf32>
    %28 = tpu.matmul %26, %27, %cst_25 {dimension_numbers = #tpu.dot_dimension_numbers<[1], [0], [0], [1], [0, 0, 1, 1], [], []>} : vector<8x256xbf16>, vector<256x256xbf16>, vector<8x256xf32> -> vector<8x256xf32>
    %29 = vector.broadcast %2 : vector<1x256xf32> to vector<8x256xf32>
    %30 = arith.addf %28, %29 : vector<8x256xf32>
    %cst_26 = arith.constant 0.000000e+00 : f32
    %31 = vector.broadcast %cst_26 : f32 to vector<8x256xf32>
    %32 = arith.maximumf %30, %31 : vector<8x256xf32>
    %33 = arith.truncf %32 : vector<8x256xf32> to vector<8x256xbf16>
    %c0_27 = arith.constant 0 : index
    %c0_28 = arith.constant 0 : index
    %34 = vector.load %arg6[%c0_27, %c0_28] : memref<256x256xbf16, #tpu.memory_space<vmem>>, vector<256x256xbf16>
    %cst_29 = arith.constant dense<0.000000e+00> : vector<8x256xf32>
    %35 = tpu.matmul %33, %34, %cst_29 {dimension_numbers = #tpu.dot_dimension_numbers<[1], [0], [0], [1], [0, 0, 1, 1], [], []>} : vector<8x256xbf16>, vector<256x256xbf16>, vector<8x256xf32> -> vector<8x256xf32>
    %36 = vector.broadcast %3 : vector<1x256xf32> to vector<8x256xf32>
    %37 = arith.addf %35, %36 : vector<8x256xf32>
    %cst_30 = arith.constant 0.000000e+00 : f32
    %38 = vector.broadcast %cst_30 : f32 to vector<8x256xf32>
    %39 = arith.maximumf %37, %38 : vector<8x256xf32>
    %40 = arith.truncf %39 : vector<8x256xf32> to vector<8x256xbf16>
    %c0_31 = arith.constant 0 : index
    %c0_32 = arith.constant 0 : index
    %41 = vector.load %arg7[%c0_31, %c0_32] : memref<256x128xbf16, #tpu.memory_space<vmem>>, vector<256x128xbf16>
    %cst_33 = arith.constant dense<0.000000e+00> : vector<8x128xf32>
    %42 = tpu.matmul %40, %41, %cst_33 {dimension_numbers = #tpu.dot_dimension_numbers<[1], [0], [0], [1], [0, 0, 1, 1], [], []>} : vector<8x256xbf16>, vector<256x128xbf16>, vector<8x128xf32> -> vector<8x128xf32>
    %43 = vector.broadcast %4 : vector<1x128xf32> to vector<8x128xf32>
    %44 = arith.addf %42, %43 : vector<8x128xf32>
    %cst_34 = arith.constant 0.000000e+00 : f32
    %45 = vector.broadcast %cst_34 : f32 to vector<8x128xf32>
    %46 = arith.maximumf %44, %45 : vector<8x128xf32>
    %47 = arith.truncf %46 : vector<8x128xf32> to vector<8x128xbf16>
    %c0_35 = arith.constant 0 : index
    %c0_36 = arith.constant 0 : index
    %48 = vector.load %arg8[%c0_35, %c0_36] : memref<128x128xbf16, #tpu.memory_space<vmem>>, vector<128x128xbf16>
    %cst_37 = arith.constant dense<0.000000e+00> : vector<8x128xf32>
    %49 = tpu.matmul %47, %48, %cst_37 {dimension_numbers = #tpu.dot_dimension_numbers<[1], [0], [0], [1], [0, 0, 1, 1], [], []>} : vector<8x128xbf16>, vector<128x128xbf16>, vector<8x128xf32> -> vector<8x128xf32>
    %50 = vector.broadcast %5 : vector<1x128xf32> to vector<8x128xf32>
    %51 = arith.addf %49, %50 : vector<8x128xf32>
    %52 = arith.truncf %51 : vector<8x128xf32> to vector<8x128xbf16>
    %c0_38 = arith.constant 0 : index
    %c0_39 = arith.constant 0 : index
    %53 = vector.load %arg10[%c0_38, %c0_39] : memref<8x128xbf16, #tpu.memory_space<vmem>>, vector<8x128xbf16>
    tpu.vector_store %arg10[%c0_38, %c0_39], %52 {strides = array<i32>} : memref<8x128xbf16, #tpu.memory_space<vmem>>, vector<8x128xbf16>,
    return
  }
  func.func @transform_0(%arg0: i32) -> (i32, i32) {
    %c0_i32 = arith.constant 0 : i32
    %c0_i32_0 = arith.constant 0 : i32
    return %arg0, %c0_i32 : i32, i32
  }
  func.func @transform_1(%arg0: i32) -> (i32, i32) {
    %c0_i32 = arith.constant 0 : i32
    %c0_i32_0 = arith.constant 0 : i32
    return %arg0, %c0_i32 : i32, i32
  }
  func.func @transform_2(%arg0: i32) -> (i32, i32) {
    %c0_i32 = arith.constant 0 : i32
    %c0_i32_0 = arith.constant 0 : i32
    %c0_i32_1 = arith.constant 0 : i32
    return %c0_i32, %c0_i32_0 : i32, i32
  }
  func.func @transform_3(%arg0: i32) -> (i32, i32) {
    %c0_i32 = arith.constant 0 : i32
    %c0_i32_0 = arith.constant 0 : i32
    %c0_i32_1 = arith.constant 0 : i32
    return %c0_i32, %c0_i32_0 : i32, i32
  }
  func.func @transform_4(%arg0: i32) -> (i32, i32) {
    %c0_i32 = arith.constant 0 : i32
    %c0_i32_0 = arith.constant 0 : i32
    %c0_i32_1 = arith.constant 0 : i32
    return %c0_i32, %c0_i32_0 : i32, i32
  }
  func.func @transform_5(%arg0: i32) -> (i32, i32) {
    %c0_i32 = arith.constant 0 : i32
    %c0_i32_0 = arith.constant 0 : i32
    %c0_i32_1 = arith.constant 0 : i32
    return %c0_i32, %c0_i32_0 : i32, i32
  }
  func.func @transform_6(%arg0: i32) -> (i32, i32) {
    %c0_i32 = arith.constant 0 : i32
    %c0_i32_0 = arith.constant 0 : i32
    %c0_i32_1 = arith.constant 0 : i32
    return %c0_i32, %c0_i32_0 : i32, i32
  }
  func.func @transform_7(%arg0: i32) -> (i32, i32) {
    %c0_i32 = arith.constant 0 : i32
    %c0_i32_0 = arith.constant 0 : i32
    %c0_i32_1 = arith.constant 0 : i32
    return %c0_i32, %c0_i32_0 : i32, i32
  }
  func.func @transform_8(%arg0: i32) -> (i32, i32) {
    %c0_i32 = arith.constant 0 : i32
    %c0_i32_0 = arith.constant 0 : i32
    %c0_i32_1 = arith.constant 0 : i32
    return %c0_i32, %c0_i32_0 : i32, i32
  }
  func.func @transform_9(%arg0: i32) -> (i32, i32) {
    %c0_i32 = arith.constant 0 : i32
    %c0_i32_0 = arith.constant 0 : i32
    return %arg0, %c0_i32 : i32, i32
  }
}

</mosaic_0001>

<llo_original>
// kernel: tpu_custom_call.1
$region0: #{tpu_custom_call.1}
  #allocation0 [shape = 'u32[]', space=smem, size = 0x4, offset = 0x4, fixed_abs, tag = 'smem constant byte address 0x4 - core index']
  #allocation1 [shape = 'u32[144,128]{1,0:T(1,128)}', space=vmem, size = 0x12000, scoped, tag = 'internal scratch']
  #allocation2 [shape = 'bf16[8,256]{1,0:T(8,128)(2,1)}', space=vmem, size = 0x1000, scoped, tag = 'scratch operand']
  %s0 = inlined_call_operand.hbm [shape: f32[16,256], index: 0, kind: input, shape index: {}]
  %s1 = inlined_call_operand.hbm [shape: f32[16,256], index: 1, kind: input, shape index: {}]
  %s2 = inlined_call_operand.hbm [shape: bf16[256,128], index: 2, kind: input, shape index: {}]
  %s3 = inlined_call_operand.hbm [shape: bf16[256,128], index: 3, kind: input, shape index: {}]
  %s4 = inlined_call_operand.hbm [shape: bf16[256,256], index: 4, kind: input, shape index: {}]
  %s5 = inlined_call_operand.hbm [shape: bf16[256,256], index: 5, kind: input, shape index: {}]
  %s6 = inlined_call_operand.hbm [shape: bf16[256,128], index: 6, kind: input, shape index: {}]
  %s7 = inlined_call_operand.hbm [shape: bf16[128,128], index: 7, kind: input, shape index: {}]
  %s8 = inlined_call_operand.vmem [shape: f32[1,1024], index: 8, kind: input, shape index: {}]
  %s9 = inlined_call_operand.hbm [shape: bf16[16,128], index: 9, kind: output, shape index: {}]
  %s10 = sld [smem:[#allocation0]]
  $region101: #{tpu_custom_call.1} parent=0
    _
  %s12 = ssub.s32 1, %s10
  %s13 = scalar_select 0, %s12, %s10
  $region1: #{tpu_custom_call.1} parent=0
    #allocation3 [shape = 'u8[16384]{0}', space=vmem, size = 0x4000, scoped, tag = 'input window, operand 0']
    #allocation4 [shape = 's32[2]{0}', space=sflag, size = 0x8, scoped, tag = 'scoped memory for tpu_custom_call.1']
    #allocation5 [shape = 's32[2]{0}', space=sflag, size = 0x8, scoped, tag = 'scoped memory for tpu_custom_call.1']
    #allocation6 [shape = 'u8[16384]{0}', space=vmem, size = 0x4000, scoped, tag = 'input window, operand 1']
    #allocation7 [shape = 's32[2]{0}', space=sflag, size = 0x8, scoped, tag = 'scoped memory for tpu_custom_call.1']
    #allocation8 [shape = 'u8[65536]{0}', space=vmem, size = 0x10000, scoped, tag = 'input window, operand 2, single buffered']
    #allocation9 [shape = 'u8[65536]{0}', space=vmem, size = 0x10000, scoped, tag = 'input window, operand 3, single buffered']
    #allocation10 [shape = 's32[1]{0}', space=sflag, size = 0x4, scoped, tag = 'scoped memory for tpu_custom_call.1']
    #allocation11 [shape = 'u8[131072]{0}', space=vmem, size = 0x20000, scoped, tag = 'input window, operand 4, single buffered']
    #allocation12 [shape = 'u8[131072]{0}', space=vmem, size = 0x20000, scoped, tag = 'input window, operand 5, single buffered']
    #allocation13 [shape = 's32[1]{0}', space=sflag, size = 0x4, scoped, tag = 'scoped memory for tpu_custom_call.1']
    #allocation14 [shape = 'u8[65536]{0}', space=vmem, size = 0x10000, scoped, tag = 'input window, operand 6, single buffered']
    #allocation15 [shape = 'u8[32768]{0}', space=vmem, size = 0x8000, scoped, tag = 'input window, operand 7, single buffered']
    #allocation16 [shape = 's32[1]{0}', space=sflag, size = 0x4, scoped, tag = 'scoped memory for tpu_custom_call.1']
    #allocation17 [shape = 'u8[4096]{0}', space=vmem, size = 0x1000, scoped, tag = 'output window, operand 0']
    %14 = vsyncpa [#allocation4], 0
    %s15 = scalar_lea.sflag [#allocation4], 1
    %16 = vsyncpa %s15, 0
    %17 = vsyncpa [#allocation7], 0
    %s18 = scalar_lea.sflag [#allocation7], 1
    %19 = vsyncpa %s18, 0
    %20 = vsyncpa [#allocation10], 0
    %21 = vsyncpa [#allocation13], 0
    %22 = vsyncpa [#allocation16], 0
    %23 = vsyncpa [#allocation5], 0
    %s24 = scalar_lea.sflag [#allocation5], 1
    %25 = vsyncpa %s24, 0
    loop: start=0, step=1, limit=4
    $region2: #{tpu_custom_call.1} parent=1 // loop_pre_header
      _
    $region3: #{tpu_custom_call.1} parent=1 // loop_header
      %s27 = sphi 0, %s31
      %p28 = scmp.ge.s32.totalorder %s27, 4
      %s37 = sphi 0, %s39
      %s40 = sphi 0, %s37
      %s41 = sphi 0, %s40
      %s57 = sphi 0, %s41
      %s63 = sphi 0, %s65
      %s66 = sphi 0, %s63
      %s67 = sphi 0, %s66
      %s83 = sphi 0, %s67
      %s87 = sphi 0, %s87
      %s89 = sphi 0, %s87
      %s90 = sphi 0, %s89
      %s104 = sphi 0, %s90
      %s108 = sphi 0, %s108
      %s110 = sphi 0, %s108
      %s111 = sphi 0, %s110
      %s125 = sphi 0, %s111
      %s129 = sphi 0, %s129
      %s131 = sphi 0, %s129
      %s132 = sphi 0, %s131
      %s146 = sphi 0, %s132
      %s150 = sphi 0, %s150
      %s152 = sphi 0, %s150
      %s153 = sphi 0, %s152
      %s167 = sphi 0, %s153
      %s171 = sphi 0, %s171
      %s173 = sphi 0, %s171
      %s174 = sphi 0, %s173
      %s188 = sphi 0, %s174
      %s192 = sphi 0, %s192
      %s194 = sphi 0, %s192
      %s195 = sphi 0, %s194
      %s209 = sphi 0, %s195
      %s213 = sphi 0, %s213
      %s215 = sphi 0, %s213
      %s216 = sphi 0, %s215
      %s230 = sphi 0, %s216
      %s236 = sphi 0, %s238
      %s239 = sphi 0, %s236
      %s240 = sphi 0, %s239
      %s256 = sphi 0, %s240
    $region4: #{tpu_custom_call.1} parent=1 // loop_header_branch
      %30 = sbr.rel (%p28) target = $region8
    $region5: #{tpu_custom_call.1} parent=1 // loop_body
      %s32 = ssub.s32 %s27, 1
      %s33 = ssub.s32 %s27, 2
      %s34 = sadd.s32 %s27, 1
      %s35 = ssub.s32 %s27, %s34
      %p36 = scmp.eq.s32.totalorder %s35, 0
      %s38 = sadd.s32 %s37, 1
      %s39 = scalar_select %p36, %s37, %s38
      %p42 = pneg %p36
      %p43 = scmp.eq.s32.totalorder %s27, 1
      %p44 = por %p42, %p43
      %p45 = scmp.ne.s32.totalorder %s37, %s40
      %p46 = scmp.eq.s32.totalorder %s27, 0
      %p47 = por %p45, %p46
      %p48 = scmp.ne.s32.totalorder %s37, %s40
      %p49 = scmp.eq.s32.totalorder %s32, 1
      %p50 = por %p48, %p49
      %p51 = scmp.ne.s32.totalorder %s40, %s41
      %p52 = scmp.eq.s32.totalorder %s32, 0
      %p53 = por %p51, %p52
      %p54 = scmp.ne.s32.totalorder %s40, %s41
      %p55 = scmp.eq.s32.totalorder %s33, 1
      %p56 = por %p54, %p55
      %p58 = scmp.ne.s32.totalorder %s41, %s57
      %p59 = scmp.eq.s32.totalorder %s33, 0
      %p60 = por %p58, %p59
      %s61 = ssub.s32 %s27, %s34
      %p62 = scmp.eq.s32.totalorder %s61, 0
      %s64 = sadd.s32 %s63, 1
      %s65 = scalar_select %p62, %s63, %s64
      %p68 = pneg %p62
      %p69 = scmp.eq.s32.totalorder %s27, 1
      %p70 = por %p68, %p69
      %p71 = scmp.ne.s32.totalorder %s63, %s66
      %p72 = scmp.eq.s32.totalorder %s27, 0
      %p73 = por %p71, %p72
      %p74 = scmp.ne.s32.totalorder %s63, %s66
      %p75 = scmp.eq.s32.totalorder %s32, 1
      %p76 = por %p74, %p75
      %p77 = scmp.ne.s32.totalorder %s66, %s67
      %p78 = scmp.eq.s32.totalorder %s32, 0
      %p79 = por %p77, %p78
      %p80 = scmp.ne.s32.totalorder %s66, %s67
      %p81 = scmp.eq.s32.totalorder %s33, 1
      %p82 = por %p80, %p81
      %p84 = scmp.ne.s32.totalorder %s67, %s83
      %p85 = scmp.eq.s32.totalorder %s33, 0
      %p86 = por %p84, %p85
      %s88 = sadd.s32 %s87, 1
      %p91 = scmp.eq.s32.totalorder %s27, 1
      %p92 = scmp.ne.s32.totalorder %s87, %s89
      %p93 = scmp.eq.s32.totalorder %s27, 0
      %p94 = por %p92, %p93
      %p95 = scmp.ne.s32.totalorder %s87, %s89
      %p96 = scmp.eq.s32.totalorder %s32, 1
      %p97 = por %p95, %p96
      %p98 = scmp.ne.s32.totalorder %s89, %s90
      %p99 = scmp.eq.s32.totalorder %s32, 0
      %p100 = por %p98, %p99
      %p101 = scmp.ne.s32.totalorder %s89, %s90
      %p102 = scmp.eq.s32.totalorder %s33, 1
      %p103 = por %p101, %p102
      %p105 = scmp.ne.s32.totalorder %s90, %s104
      %p106 = scmp.eq.s32.totalorder %s33, 0
      %p107 = por %p105, %p106
      %s109 = sadd.s32 %s108, 1
      %p112 = scmp.eq.s32.totalorder %s27, 1
      %p113 = scmp.ne.s32.totalorder %s108, %s110
      %p114 = scmp.eq.s32.totalorder %s27, 0
      %p115 = por %p113, %p114
      %p116 = scmp.ne.s32.totalorder %s108, %s110
      %p117 = scmp.eq.s32.totalorder %s32, 1
      %p118 = por %p116, %p117
      %p119 = scmp.ne.s32.totalorder %s110, %s111
      %p120 = scmp.eq.s32.totalorder %s32, 0
      %p121 = por %p119, %p120
      %p122 = scmp.ne.s32.totalorder %s110, %s111
      %p123 = scmp.eq.s32.totalorder %s33, 1
      %p124 = por %p122, %p123
      %p126 = scmp.ne.s32.totalorder %s111, %s125
      %p127 = scmp.eq.s32.totalorder %s33, 0
      %p128 = por %p126, %p127
      %s130 = sadd.s32 %s129, 1
      %p133 = scmp.eq.s32.totalorder %s27, 1
      %p134 = scmp.ne.s32.totalorder %s129, %s131
      %p135 = scmp.eq.s32.totalorder %s27, 0
      %p136 = por %p134, %p135
      %p137 = scmp.ne.s32.totalorder %s129, %s131
      %p138 = scmp.eq.s32.totalorder %s32, 1
      %p139 = por %p137, %p138
      %p140 = scmp.ne.s32.totalorder %s131, %s132
      %p141 = scmp.eq.s32.totalorder %s32, 0
      %p142 = por %p140, %p141
      %p143 = scmp.ne.s32.totalorder %s131, %s132
      %p144 = scmp.eq.s32.totalorder %s33, 1
      %p145 = por %p143, %p144
      %p147 = scmp.ne.s32.totalorder %s132, %s146
      %p148 = scmp.eq.s32.totalorder %s33, 0
      %p149 = por %p147, %p148
      %s151 = sadd.s32 %s150, 1
      %p154 = scmp.eq.s32.totalorder %s27, 1
      %p155 = scmp.ne.s32.totalorder %s150, %s152
      %p156 = scmp.eq.s32.totalorder %s27, 0
      %p157 = por %p155, %p156
      %p158 = scmp.ne.s32.totalorder %s150, %s152
      %p159 = scmp.eq.s32.totalorder %s32, 1
      %p160 = por %p158, %p159
      %p161 = scmp.ne.s32.totalorder %s152, %s153
      %p162 = scmp.eq.s32.totalorder %s32, 0
      %p163 = por %p161, %p162
      %p164 = scmp.ne.s32.totalorder %s152, %s153
      %p165 = scmp.eq.s32.totalorder %s33, 1
      %p166 = por %p164, %p165
      %p168 = scmp.ne.s32.totalorder %s153, %s167
      %p169 = scmp.eq.s32.totalorder %s33, 0
      %p170 = por %p168, %p169
      %s172 = sadd.s32 %s171, 1
      %p175 = scmp.eq.s32.totalorder %s27, 1
      %p176 = scmp.ne.s32.totalorder %s171, %s173
      %p177 = scmp.eq.s32.totalorder %s27, 0
      %p178 = por %p176, %p177
      %p179 = scmp.ne.s32.totalorder %s171, %s173
      %p180 = scmp.eq.s32.totalorder %s32, 1
      %p181 = por %p179, %p180
      %p182 = scmp.ne.s32.totalorder %s173, %s174
      %p183 = scmp.eq.s32.totalorder %s32, 0
      %p184 = por %p182, %p183
      %p185 = scmp.ne.s32.totalorder %s173, %s174
      %p186 = scmp.eq.s32.totalorder %s33, 1
      %p187 = por %p185, %p186
      %p189 = scmp.ne.s32.totalorder %s174, %s188
      %p190 = scmp.eq.s32.totalorder %s33, 0
      %p191 = por %p189, %p190
      %s193 = sadd.s32 %s192, 1
      %p196 = scmp.eq.s32.totalorder %s27, 1
      %p197 = scmp.ne.s32.totalorder %s192, %s194
      %p198 = scmp.eq.s32.totalorder %s27, 0
      %p199 = por %p197, %p198
      %p200 = scmp.ne.s32.totalorder %s192, %s194
      %p201 = scmp.eq.s32.totalorder %s32, 1
      %p202 = por %p200, %p201
      %p203 = scmp.ne.s32.totalorder %s194, %s195
      %p204 = scmp.eq.s32.totalorder %s32, 0
      %p205 = por %p203, %p204
      %p206 = scmp.ne.s32.totalorder %s194, %s195
      %p207 = scmp.eq.s32.totalorder %s33, 1
      %p208 = por %p206, %p207
      %p210 = scmp.ne.s32.totalorder %s195, %s209
      %p211 = scmp.eq.s32.totalorder %s33, 0
      %p212 = por %p210, %p211
      %s214 = sadd.s32 %s213, 1
      %p217 = scmp.eq.s32.totalorder %s27, 1
      %p218 = scmp.ne.s32.totalorder %s213, %s215
      %p219 = scmp.eq.s32.totalorder %s27, 0
      %p220 = por %p218, %p219
      %p221 = scmp.ne.s32.totalorder %s213, %s215
      %p222 = scmp.eq.s32.totalorder %s32, 1
      %p223 = por %p221, %p222
      %p224 = scmp.ne.s32.totalorder %s215, %s216
      %p225 = scmp.eq.s32.totalorder %s32, 0
      %p226 = por %p224, %p225
      %p227 = scmp.ne.s32.totalorder %s215, %s216
      %p228 = scmp.eq.s32.totalorder %s33, 1
      %p229 = por %p227, %p228
      %p231 = scmp.ne.s32.totalorder %s216, %s230
      %p232 = scmp.eq.s32.totalorder %s33, 0
      %p233 = por %p231, %p232
      %s234 = ssub.s32 %s27, %s34
      %p235 = scmp.eq.s32.totalorder %s234, 0
      %s237 = sadd.s32 %s236, 1
      %s238 = scalar_select %p235, %s236, %s237
      %p241 = pneg %p235
      %p242 = scmp.eq.s32.totalorder %s27, 1
      %p243 = por %p241, %p242
      %p244 = scmp.ne.s32.totalorder %s236, %s239
      %p245 = scmp.eq.s32.totalorder %s27, 0
      %p246 = por %p244, %p245
      %p247 = scmp.ne.s32.totalorder %s236, %s239
      %p248 = scmp.eq.s32.totalorder %s32, 1
      %p249 = por %p247, %p248
      %p250 = scmp.ne.s32.totalorder %s239, %s240
      %p251 = scmp.eq.s32.totalorder %s32, 0
      %p252 = por %p250, %p251
      %p253 = scmp.ne.s32.totalorder %s239, %s240
      %p254 = scmp.eq.s32.totalorder %s33, 1
      %p255 = por %p253, %p254
      %p257 = scmp.ne.s32.totalorder %s240, %s256
      %p258 = scmp.eq.s32.totalorder %s33, 0
      %p259 = por %p257, %p258
      %p260 = scmp.le.s32.totalorder 1, %s27
      %p261 = scmp.lt.s32.totalorder %s27, 3
      %p262 = pnand %p260, %p261
      %p263 = pneg %p262
      // Predicated region
      $region9: #{tpu_custom_call.1} parent=5 // pred_check
        _
      $region10: #{tpu_custom_call.1} parent=5 // pred_check_branch
        %265 = sbr.rel (%p262) target = $region12
      $region11: #{tpu_custom_call.1} parent=5 // pred_region
        %s266 = ssub.s32 %s27, 1
        // Predicated region
        $region13: #{tpu_custom_call.1} parent=11 // pred_check
          %p267 = pneg %p100
        $region14: #{tpu_custom_call.1} parent=11 // pred_check_branch
          %269 = sbr.rel (%p267) target = $region16
        $region15: #{tpu_custom_call.1} parent=11 // pred_region
          %s271 = ssub.s32 2048, 2048
          %272 = vsyncadd [#allocation7], %s271
          %s273 = sshll.u32 [#allocation8], 4
          %s274 = int_to_ptr.vmem [resolvable:$true] %s273
          %279 = dma.hbm_to_vmem [thread:$0]  %s2, 2048, %s274, [#allocation7], 64, 64, 4
        $region16: #{tpu_custom_call.1} parent=11 // pred_fallthru
          _
        // Predicated region
        $region17: #{tpu_custom_call.1} parent=11 // pred_check
          %p280 = pneg %p121
        $region18: #{tpu_custom_call.1} parent=11 // pred_check_branch
          %282 = sbr.rel (%p280) target = $region20
        $region19: #{tpu_custom_call.1} parent=11 // pred_region
          %s284 = ssub.s32 2048, 2048
          %285 = vsyncadd [#allocation10], %s284
          %s286 = sshll.u32 [#allocation9], 4
          %s287 = int_to_ptr.vmem [resolvable:$true] %s286
          %292 = dma.hbm_to_vmem [thread:$0]  %s3, 2048, %s287, [#allocation10], 64, 64, 4
        $region20: #{tpu_custom_call.1} parent=11 // pred_fallthru
          _
        // Predicated region
        $region21: #{tpu_custom_call.1} parent=11 // pred_check
          %p293 = pneg %p142
        $region22: #{tpu_custom_call.1} parent=11 // pred_check_branch
          %295 = sbr.rel (%p293) target = $region24
        $region23: #{tpu_custom_call.1} parent=11 // pred_region
          %s297 = ssub.s32 4096, 4096
          %298 = vsyncadd [#allocation10], %s297
          %s299 = sshll.u32 [#allocation11], 4
          %s300 = int_to_ptr.vmem [resolvable:$true] %s299
          %305 = dma.hbm_to_vmem [thread:$0]  %s4, 4096, %s300, [#allocation10], 128, 128, 8
        $region24: #{tpu_custom_call.1} parent=11 // pred_fallthru
          _
        // Predicated region
        $region25: #{tpu_custom_call.1} parent=11 // pred_check
          %p306 = pneg %p163
        $region26: #{tpu_custom_call.1} parent=11 // pred_check_branch
          %308 = sbr.rel (%p306) target = $region28
        $region27: #{tpu_custom_call.1} parent=11 // pred_region
          %s310 = ssub.s32 4096, 4096
          %311 = vsyncadd [#allocation13], %s310
          %s312 = sshll.u32 [#allocation12], 4
          %s313 = int_to_ptr.vmem [resolvable:$true] %s312
          %318 = dma.hbm_to_vmem [thread:$0]  %s5, 4096, %s313, [#allocation13], 128, 128, 8
        $region28: #{tpu_custom_call.1} parent=11 // pred_fallthru
          _
        // Predicated region
        $region29: #{tpu_custom_call.1} parent=11 // pred_check
          %p319 = pneg %p184
        $region30: #{tpu_custom_call.1} parent=11 // pred_check_branch
          %321 = sbr.rel (%p319) target = $region32
        $region31: #{tpu_custom_call.1} parent=11 // pred_region
          %s323 = ssub.s32 2048, 2048
          %324 = vsyncadd [#allocation13], %s323
          %s325 = sshll.u32 [#allocation14], 4
          %s326 = int_to_ptr.vmem [resolvable:$true] %s325
          %331 = dma.hbm_to_vmem [thread:$0]  %s6, 2048, %s326, [#allocation13], 64, 64, 4
        $region32: #{tpu_custom_call.1} parent=11 // pred_fallthru
          _
        // Predicated region
        $region33: #{tpu_custom_call.1} parent=11 // pred_check
          %p332 = pneg %p205
        $region34: #{tpu_custom_call.1} parent=11 // pred_check_branch
          %334 = sbr.rel (%p332) target = $region36
        $region35: #{tpu_custom_call.1} parent=11 // pred_region
          %s336 = ssub.s32 1024, 1024
          %337 = vsyncadd [#allocation16], %s336
          %s338 = sshll.u32 [#allocation15], 4
          %s339 = int_to_ptr.vmem [resolvable:$true] %s338
          %344 = dma.hbm_to_vmem [thread:$0]  %s7, 1024, %s339, [#allocation16], 64, 64, 4
        $region36: #{tpu_custom_call.1} parent=11 // pred_fallthru
          _
        // Predicated region
        $region37: #{tpu_custom_call.1} parent=11 // pred_check
          %p345 = pneg %p226
        $region38: #{tpu_custom_call.1} parent=11 // pred_check_branch
          %347 = sbr.rel (%p345) target = $region40
        $region39: #{tpu_custom_call.1} parent=11 // pred_region
          _
        $region40: #{tpu_custom_call.1} parent=11 // pred_fallthru
          _
      $region12: #{tpu_custom_call.1} parent=5 // pred_fallthru
        _
      %p348 = scmp.lt.s32.totalorder %s27, 2
      // Predicated region
      $region41: #{tpu_custom_call.1} parent=5 // pred_check
        %p349 = pneg %p348
      $region42: #{tpu_custom_call.1} parent=5 // pred_check_branch
        %351 = sbr.rel (%p349) target = $region44
      $region43: #{tpu_custom_call.1} parent=5 // pred_region
        // Predicated region
        $region45: #{tpu_custom_call.1} parent=43 // pred_check
          %p352 = pneg %p47
        $region46: #{tpu_custom_call.1} parent=43 // pred_check_branch
          %354 = sbr.rel (%p352) target = $region48
        $region47: #{tpu_custom_call.1} parent=43 // pred_region
          %s355 = sand.u32 %s37, 1
          %s356 = scalar_lea.sflag [#allocation4], %s355
          %s357 = sand.u32 %s37, 1
          %s358 = smul.addr %s357, 16
          %s359 = scalar_lea.vmem [#allocation3], %s358
          %s361 = ssub.s32 256, 256
          %362 = vsyncadd %s356, %s361
          %s363 = smul.addr %s27, 2
          %s364 = smul.addr %s363, 128
          %s365 = scalar_lea.hbm %s0, %s364
          %s367 = sshll.u32 %s359, 4
          %s368 = int_to_ptr.vmem [resolvable:$true] %s367
          %370 = dma.hbm_to_vmem [thread:$0]  %s365, 256, %s368, %s356
        $region48: #{tpu_custom_call.1} parent=43 // pred_fallthru
          _
        // Predicated region
        $region49: #{tpu_custom_call.1} parent=43 // pred_check
          %p371 = pneg %p73
        $region50: #{tpu_custom_call.1} parent=43 // pred_check_branch
          %373 = sbr.rel (%p371) target = $region52
        $region51: #{tpu_custom_call.1} parent=43 // pred_region
          %s374 = sand.u32 %s27, 1
          %s375 = scalar_lea.sflag [#allocation7], %s374
          %s376 = sand.u32 %s63, 1
          %s377 = smul.addr %s376, 16
          %s378 = scalar_lea.vmem [#allocation6], %s377
          %s380 = ssub.s32 256, 256
          %381 = vsyncadd %s375, %s380
          %s382 = smul.addr %s27, 2
          %s383 = smul.addr %s382, 128
          %s384 = scalar_lea.hbm %s1, %s383
          %s386 = sshll.u32 %s378, 4
          %s387 = int_to_ptr.vmem [resolvable:$true] %s386
          %389 = dma.hbm_to_vmem [thread:$0]  %s384, 256, %s387, %s375
        $region52: #{tpu_custom_call.1} parent=43 // pred_fallthru
          _
      $region44: #{tpu_custom_call.1} parent=5 // pred_fallthru
        _
      %p390 = scmp.le.s32.totalorder 1, %s27
      %p391 = scmp.lt.s32.totalorder %s27, 3
      %p392 = pnand %p390, %p391
      %p393 = pneg %p392
      // Predicated region
      $region53: #{tpu_custom_call.1} parent=5 // pred_check
        _
      $region54: #{tpu_custom_call.1} parent=5 // pred_check_branch
        %395 = sbr.rel (%p392) target = $region56
      $region55: #{tpu_custom_call.1} parent=5 // pred_region
        %s396 = ssub.s32 %s27, 1
        %s397 = sand.u32 %s40, 1
        %s398 = scalar_lea.sflag [#allocation4], %s397
        %s399 = sand.u32 %s40, 1
        %s400 = smul.addr %s399, 16
        %s401 = scalar_lea.vmem [#allocation3], %s400
        // Predicated region
        $region57: #{tpu_custom_call.1} parent=55 // pred_check
          %p402 = pneg %p53
        $region58: #{tpu_custom_call.1} parent=55 // pred_check_branch
          %404 = sbr.rel (%p402) target = $region60
        $region59: #{tpu_custom_call.1} parent=55 // pred_region
          %405 = dma.done %s398, 256
        $region60: #{tpu_custom_call.1} parent=55 // pred_fallthru
          _
        %s406 = sand.u32 %s32, 1
        %s407 = scalar_lea.sflag [#allocation7], %s406
        %s408 = sand.u32 %s66, 1
        %s409 = smul.addr %s408, 16
        %s410 = scalar_lea.vmem [#allocation6], %s409
        // Predicated region
        $region61: #{tpu_custom_call.1} parent=55 // pred_check
          %p411 = pneg %p79
        $region62: #{tpu_custom_call.1} parent=55 // pred_check_branch
          %413 = sbr.rel (%p411) target = $region64
        $region63: #{tpu_custom_call.1} parent=55 // pred_region
          %414 = dma.done %s407, 256
        $region64: #{tpu_custom_call.1} parent=55 // pred_fallthru
          _
        // Predicated region
        $region65: #{tpu_custom_call.1} parent=55 // pred_check
          %p415 = pneg %p100
        $region66: #{tpu_custom_call.1} parent=55 // pred_check_branch
          %417 = sbr.rel (%p415) target = $region68
        $region67: #{tpu_custom_call.1} parent=55 // pred_region
          %418 = dma.done [#allocation7], 2048
        $region68: #{tpu_custom_call.1} parent=55 // pred_fallthru
          _
        // Predicated region
        $region69: #{tpu_custom_call.1} parent=55 // pred_check
          %p419 = pneg %p121
        $region70: #{tpu_custom_call.1} parent=55 // pred_check_branch
          %421 = sbr.rel (%p419) target = $region72
        $region71: #{tpu_custom_call.1} parent=55 // pred_region
          %422 = dma.done [#allocation10], 2048
        $region72: #{tpu_custom_call.1} parent=55 // pred_fallthru
          _
        // Predicated region
        $region73: #{tpu_custom_call.1} parent=55 // pred_check
          %p423 = pneg %p142
        $region74: #{tpu_custom_call.1} parent=55 // pred_check_branch
          %425 = sbr.rel (%p423) target = $region76
        $region75: #{tpu_custom_call.1} parent=55 // pred_region
          %426 = dma.done [#allocation10], 4096
        $region76: #{tpu_custom_call.1} parent=55 // pred_fallthru
          _
        // Predicated region
        $region77: #{tpu_custom_call.1} parent=55 // pred_check
          %p427 = pneg %p163
        $region78: #{tpu_custom_call.1} parent=55 // pred_check_branch
          %429 = sbr.rel (%p427) target = $region80
        $region79: #{tpu_custom_call.1} parent=55 // pred_region
          %430 = dma.done [#allocation13], 4096
        $region80: #{tpu_custom_call.1} parent=55 // pred_fallthru
          _
        // Predicated region
        $region81: #{tpu_custom_call.1} parent=55 // pred_check
          %p431 = pneg %p184
        $region82: #{tpu_custom_call.1} parent=55 // pred_check_branch
          %433 = sbr.rel (%p431) target = $region84
        $region83: #{tpu_custom_call.1} parent=55 // pred_region
          %434 = dma.done [#allocation13], 2048
        $region84: #{tpu_custom_call.1} parent=55 // pred_fallthru
          _
        // Predicated region
        $region85: #{tpu_custom_call.1} parent=55 // pred_check
          %p435 = pneg %p205
        $region86: #{tpu_custom_call.1} parent=55 // pred_check_branch
          %437 = sbr.rel (%p435) target = $region88
        $region87: #{tpu_custom_call.1} parent=55 // pred_region
          %438 = dma.done [#allocation16], 1024
        $region88: #{tpu_custom_call.1} parent=55 // pred_fallthru
          _
        %s439 = sand.u32 %s40, 1
        %s440 = scalar_lea.sflag [#allocation4], %s439
        %s441 = sand.u32 %s40, 1
        %s442 = smul.addr %s441, 16
        %s443 = scalar_lea.vmem [#allocation3], %s442
        %p444 = pneg %p53
        %p445 = pneg %p50
        %s446 = sand.u32 %s32, 1
        %s447 = scalar_lea.sflag [#allocation7], %s446
        %s448 = sand.u32 %s66, 1
        %s449 = smul.addr %s448, 16
        %s450 = scalar_lea.vmem [#allocation6], %s449
        %p451 = pneg %p79
        %p452 = pneg %p76
        %p453 = pneg %p100
        %p454 = pneg %p97
        %p455 = pneg %p121
        %p456 = pneg %p118
        %p457 = pneg %p142
        %p458 = pneg %p139
        %p459 = pneg %p163
        %p460 = pneg %p160
        %p461 = pneg %p184
        %p462 = pneg %p181
        %p463 = pneg %p205
        %p464 = pneg %p202
        %p465 = pneg %p226
        %p466 = pneg %p223
        %p467 = pneg %p252
        %p468 = pneg %p249
        %s469 = sand.u32 %s239, 1
        %s470 = scalar_lea.sflag [#allocation5], %s469
        %s471 = sand.u32 %s239, 1
        %s472 = smul.addr %s471, 4
        %s473 = scalar_lea.vmem [#allocation17], %s472
        %v475 = vld [vmem:[%s8] sm:$0x1]
        %v476 = vld [vmem:[%s8 + $0x1] sm:$0x1]
        %v477 = vld [vmem:[%s8 + $0x2] sm:$0x3]
        %v478 = vld [vmem:[%s8 + $0x4] sm:$0x3]
        %v479 = vld [vmem:[%s8 + $0x6] sm:$0x1]
        %v480 = vld [vmem:[%s8 + $0x7] sm:$0x1]
        %v481 = vld [vmem:[%s401] sm:$0xff]
        %v482 = vld [vmem:[%s401 + $0x8] sm:$0xff]
        %v483 = vpack.c.bf16 %v481, %v481
        %v484 = vpack.c.bf16 %v482, %v482
        %v485 = vld [vmem:[#allocation8] sm:$0xf]
        %v486 = vld [vmem:[#allocation8 + $0x4] sm:$0xf]
        %v487 = vld [vmem:[#allocation8 + $0x8] sm:$0xf]
        %v488 = vld [vmem:[#allocation8 + $0xc] sm:$0xf]
        %v489 = vld [vmem:[#allocation8 + $0x10] sm:$0xf]
        %v490 = vld [vmem:[#allocation8 + $0x14] sm:$0xf]
        %v491 = vld [vmem:[#allocation8 + $0x18] sm:$0xf]
        %v492 = vld [vmem:[#allocation8 + $0x1c] sm:$0xf]
        %v493 = vld [vmem:[#allocation8 + $0x20] sm:$0xf]
        %v494 = vld [vmem:[#allocation8 + $0x24] sm:$0xf]
        %v495 = vld [vmem:[#allocation8 + $0x28] sm:$0xf]
        %v496 = vld [vmem:[#allocation8 + $0x2c] sm:$0xf]
        %v497 = vld [vmem:[#allocation8 + $0x30] sm:$0xf]
        %v498 = vld [vmem:[#allocation8 + $0x34] sm:$0xf]
        %v499 = vld [vmem:[#allocation8 + $0x38] sm:$0xf]
        %v500 = vld [vmem:[#allocation8 + $0x3c] sm:$0xf]
        %v501 = vld [vmem:[#allocation8 + $0x40] sm:$0xf]
        %v502 = vld [vmem:[#allocation8 + $0x44] sm:$0xf]
        %v503 = vld [vmem:[#allocation8 + $0x48] sm:$0xf]
        %v504 = vld [vmem:[#allocation8 + $0x4c] sm:$0xf]
        %v505 = vld [vmem:[#allocation8 + $0x50] sm:$0xf]
        %v506 = vld [vmem:[#allocation8 + $0x54] sm:$0xf]
        %v507 = vld [vmem:[#allocation8 + $0x58] sm:$0xf]
        %v508 = vld [vmem:[#allocation8 + $0x5c] sm:$0xf]
        %v509 = vld [vmem:[#allocation8 + $0x60] sm:$0xf]
        %v510 = vld [vmem:[#allocation8 + $0x64] sm:$0xf]
        %v511 = vld [vmem:[#allocation8 + $0x68] sm:$0xf]
        %v512 = vld [vmem:[#allocation8 + $0x6c] sm:$0xf]
        %v513 = vld [vmem:[#allocation8 + $0x70] sm:$0xf]
        %v514 = vld [vmem:[#allocation8 + $0x74] sm:$0xf]
        %v515 = vld [vmem:[#allocation8 + $0x78] sm:$0xf]
        %v516 = vld [vmem:[#allocation8 + $0x7c] sm:$0xf]
        %v518 = vlaneseq
        %v519 = vshrl.u32 %v518, 7
        %v520 = vsub.s32 0, %v519
        %v521 = vrot.slane %v475, %v520
        %v555 = vunpack.c.l.b16 %v485
        %v556 = vunpack.c.l.b16 %v486
        %v557 = vunpack.c.l.b16 %v487
        %v558 = vunpack.c.l.b16 %v488
        %v559 = vunpack.c.l.b16 %v489
        %v560 = vunpack.c.l.b16 %v490
        %v561 = vunpack.c.l.b16 %v491
        %v562 = vunpack.c.l.b16 %v492
        %v563 = vunpack.c.l.b16 %v493
        %v564 = vunpack.c.l.b16 %v494
        %v565 = vunpack.c.l.b16 %v495
        %v566 = vunpack.c.l.b16 %v496
        %v567 = vunpack.c.l.b16 %v497
        %v568 = vunpack.c.l.b16 %v498
        %v569 = vunpack.c.l.b16 %v499
        %v570 = vunpack.c.l.b16 %v500
        %v571 = vunpack.c.l.b16 %v501
        %v572 = vunpack.c.l.b16 %v502
        %v573 = vunpack.c.l.b16 %v503
        %v574 = vunpack.c.l.b16 %v504
        %v575 = vunpack.c.l.b16 %v505
        %v576 = vunpack.c.l.b16 %v506
        %v577 = vunpack.c.l.b16 %v507
        %v578 = vunpack.c.l.b16 %v508
        %v579 = vunpack.c.l.b16 %v509
        %v580 = vunpack.c.l.b16 %v510
        %v581 = vunpack.c.l.b16 %v511
        %v582 = vunpack.c.l.b16 %v512
        %v583 = vunpack.c.l.b16 %v513
        %v584 = vunpack.c.l.b16 %v514
        %v585 = vunpack.c.l.b16 %v515
        %v586 = vunpack.c.l.b16 %v516
        %v587 = vpack.c.b16 %v556, %v555
        %v588 = vpack.c.b16 %v558, %v557
        %v589 = vpack.c.b16 %v560, %v559
        %v590 = vpack.c.b16 %v562, %v561
        %v591 = vpack.c.b16 %v564, %v563
        %v592 = vpack.c.b16 %v566, %v565
        %v593 = vpack.c.b16 %v568, %v567
        %v594 = vpack.c.b16 %v570, %v569
        %v595 = vpack.c.b16 %v572, %v571
        %v596 = vpack.c.b16 %v574, %v573
        %v597 = vpack.c.b16 %v576, %v575
        %v598 = vpack.c.b16 %v578, %v577
        %v599 = vpack.c.b16 %v580, %v579
        %v600 = vpack.c.b16 %v582, %v581
        %v601 = vpack.c.b16 %v584, %v583
        %v602 = vpack.c.b16 %v586, %v585
        %619 = vmatprep.subr.bf16.mxu0 0
        %620 = vmatpush1.bf16.msra.mxu0 %v594
        %621 = vmatprep.subr.bf16.mxu0 0
        %622 = vmatpush1.bf16.msra.mxu0 %v593
        %623 = vmatprep.subr.bf16.mxu0 0
        %624 = vmatpush1.bf16.msra.mxu0 %v592
        %625 = vmatprep.subr.bf16.mxu0 0
        %626 = vmatpush1.bf16.msra.mxu0 %v591
        %627 = vmatprep.subr.bf16.mxu0 0
        %628 = vmatpush1.bf16.msra.mxu0 %v590
        %629 = vmatprep.subr.bf16.mxu0 0
        %630 = vmatpush1.bf16.msra.mxu0 %v589
        %631 = vmatprep.subr.bf16.mxu0 0
        %632 = vmatpush1.bf16.msra.mxu0 %v588
        %633 = vmatprep.subr.bf16.mxu0 0
        %634 = vmatpush1.bf16.msra.mxu0 %v587
        %635 = vmatprep.subr.bf16.mxu0 0
        %636 = vmatpush2.bf16.msra.mxu0 %v602
        %637 = vmatprep.subr.bf16.mxu0 0
        %638 = vmatpush2.bf16.msra.mxu0 %v601
        %639 = vmatprep.subr.bf16.mxu0 0
        %640 = vmatpush2.bf16.msra.mxu0 %v600
        %641 = vmatprep.subr.bf16.mxu0 0
        %642 = vmatpush2.bf16.msra.mxu0 %v599
        %643 = vmatprep.subr.bf16.mxu0 0
        %644 = vmatpush2.bf16.msra.mxu0 %v598
        %645 = vmatprep.subr.bf16.mxu0 0
        %646 = vmatpush2.bf16.msra.mxu0 %v597
        %647 = vmatprep.subr.bf16.mxu0 0
        %648 = vmatpush2.bf16.msra.mxu0 %v596
        %649 = vmatprep.subr.bf16.mxu0 0
        %650 = vmatpush2.bf16.msra.mxu0 %v595
        %651 = vmatprep.mubr.bf16.mxu0 %v484
        %652 = vmatmul.mubr.bf16.gmra.mxu0 %v483
        %v653 = vpop.f32.mrf.mxu0
        %v654 = vadd.f32 %v521, %v653
        %v655 = vpop.f32.mrf.mxu0
        %v656 = vpop.f32.mrf.mxu0
        %v657 = vpop.f32.mrf.mxu0
        %658 = vdwg.mxu0
        %v659 = vld [vmem:[%s410] sm:$0xff]
        %v660 = vld [vmem:[%s410 + $0x8] sm:$0xff]
        %v661 = vpack.c.bf16 %v659, %v659
        %v662 = vpack.c.bf16 %v660, %v660
        %v663 = vld [vmem:[#allocation9] sm:$0xf]
        %v664 = vld [vmem:[#allocation9 + $0x4] sm:$0xf]
        %v665 = vld [vmem:[#allocation9 + $0x8] sm:$0xf]
        %v666 = vld [vmem:[#allocation9 + $0xc] sm:$0xf]
        %v667 = vld [vmem:[#allocation9 + $0x10] sm:$0xf]
        %v668 = vld [vmem:[#allocation9 + $0x14] sm:$0xf]
        %v669 = vld [vmem:[#allocation9 + $0x18] sm:$0xf]
        %v670 = vld [vmem:[#allocation9 + $0x1c] sm:$0xf]
        %v671 = vld [vmem:[#allocation9 + $0x20] sm:$0xf]
        %v672 = vld [vmem:[#allocation9 + $0x24] sm:$0xf]
        %v673 = vld [vmem:[#allocation9 + $0x28] sm:$0xf]
        %v674 = vld [vmem:[#allocation9 + $0x2c] sm:$0xf]
        %v675 = vld [vmem:[#allocation9 + $0x30] sm:$0xf]
        %v676 = vld [vmem:[#allocation9 + $0x34] sm:$0xf]
        %v677 = vld [vmem:[#allocation9 + $0x38] sm:$0xf]
        %v678 = vld [vmem:[#allocation9 + $0x3c] sm:$0xf]
        %v679 = vld [vmem:[#allocation9 + $0x40] sm:$0xf]
        %v680 = vld [vmem:[#allocation9 + $0x44] sm:$0xf]
        %v681 = vld [vmem:[#allocation9 + $0x48] sm:$0xf]
        %v682 = vld [vmem:[#allocation9 + $0x4c] sm:$0xf]
        %v683 = vld [vmem:[#allocation9 + $0x50] sm:$0xf]
        %v684 = vld [vmem:[#allocation9 + $0x54] sm:$0xf]
        %v685 = vld [vmem:[#allocation9 + $0x58] sm:$0xf]
        %v686 = vld [vmem:[#allocation9 + $0x5c] sm:$0xf]
        %v687 = vld [vmem:[#allocation9 + $0x60] sm:$0xf]
        %v688 = vld [vmem:[#allocation9 + $0x64] sm:$0xf]
        %v689 = vld [vmem:[#allocation9 + $0x68] sm:$0xf]
        %v690 = vld [vmem:[#allocation9 + $0x6c] sm:$0xf]
        %v691 = vld [vmem:[#allocation9 + $0x70] sm:$0xf]
        %v692 = vld [vmem:[#allocation9 + $0x74] sm:$0xf]
        %v693 = vld [vmem:[#allocation9 + $0x78] sm:$0xf]
        %v694 = vld [vmem:[#allocation9 + $0x7c] sm:$0xf]
        %v696 = vlaneseq
        %v697 = vshrl.u32 %v696, 7
        %v698 = vsub.s32 0, %v697
        %v699 = vrot.slane %v476, %v698
        %v733 = vunpack.c.l.b16 %v663
        %v734 = vunpack.c.l.b16 %v664
        %v735 = vunpack.c.l.b16 %v665
        %v736 = vunpack.c.l.b16 %v666
        %v737 = vunpack.c.l.b16 %v667
        %v738 = vunpack.c.l.b16 %v668
        %v739 = vunpack.c.l.b16 %v669
        %v740 = vunpack.c.l.b16 %v670
        %v741 = vunpack.c.l.b16 %v671
        %v742 = vunpack.c.l.b16 %v672
        %v743 = vunpack.c.l.b16 %v673
        %v744 = vunpack.c.l.b16 %v674
        %v745 = vunpack.c.l.b16 %v675
        %v746 = vunpack.c.l.b16 %v676
        %v747 = vunpack.c.l.b16 %v677
        %v748 = vunpack.c.l.b16 %v678
        %v749 = vunpack.c.l.b16 %v679
        %v750 = vunpack.c.l.b16 %v680
        %v751 = vunpack.c.l.b16 %v681
        %v752 = vunpack.c.l.b16 %v682
        %v753 = vunpack.c.l.b16 %v683
        %v754 = vunpack.c.l.b16 %v684
        %v755 = vunpack.c.l.b16 %v685
        %v756 = vunpack.c.l.b16 %v686
        %v757 = vunpack.c.l.b16 %v687
        %v758 = vunpack.c.l.b16 %v688
        %v759 = vunpack.c.l.b16 %v689
        %v760 = vunpack.c.l.b16 %v690
        %v761 = vunpack.c.l.b16 %v691
        %v762 = vunpack.c.l.b16 %v692
        %v763 = vunpack.c.l.b16 %v693
        %v764 = vunpack.c.l.b16 %v694
        %v765 = vpack.c.b16 %v734, %v733
        %v766 = vpack.c.b16 %v736, %v735
        %v767 = vpack.c.b16 %v738, %v737
        %v768 = vpack.c.b16 %v740, %v739
        %v769 = vpack.c.b16 %v742, %v741
        %v770 = vpack.c.b16 %v744, %v743
        %v771 = vpack.c.b16 %v746, %v745
        %v772 = vpack.c.b16 %v748, %v747
        %v773 = vpack.c.b16 %v750, %v749
        %v774 = vpack.c.b16 %v752, %v751
        %v775 = vpack.c.b16 %v754, %v753
        %v776 = vpack.c.b16 %v756, %v755
        %v777 = vpack.c.b16 %v758, %v757
        %v778 = vpack.c.b16 %v760, %v759
        %v779 = vpack.c.b16 %v762, %v761
        %v780 = vpack.c.b16 %v764, %v763
        %797 = vmatprep.subr.bf16.mxu0 0
        %798 = vmatpush1.bf16.msra.mxu0 %v772
        %799 = vmatprep.subr.bf16.mxu0 0
        %800 = vmatpush1.bf16.msra.mxu0 %v771
        %801 = vmatprep.subr.bf16.mxu0 0
        %802 = vmatpush1.bf16.msra.mxu0 %v770
        %803 = vmatprep.subr.bf16.mxu0 0
        %804 = vmatpush1.bf16.msra.mxu0 %v769
        %805 = vmatprep.subr.bf16.mxu0 0
        %806 = vmatpush1.bf16.msra.mxu0 %v768
        %807 = vmatprep.subr.bf16.mxu0 0
        %808 = vmatpush1.bf16.msra.mxu0 %v767
        %809 = vmatprep.subr.bf16.mxu0 0
        %810 = vmatpush1.bf16.msra.mxu0 %v766
        %811 = vmatprep.subr.bf16.mxu0 0
        %812 = vmatpush1.bf16.msra.mxu0 %v765
        %813 = vmatprep.subr.bf16.mxu0 0
        %814 = vmatpush2.bf16.msra.mxu0 %v780
        %815 = vmatprep.subr.bf16.mxu0 0
        %816 = vmatpush2.bf16.msra.mxu0 %v779
        %817 = vmatprep.subr.bf16.mxu0 0
        %818 = vmatpush2.bf16.msra.mxu0 %v778
        %819 = vmatprep.subr.bf16.mxu0 0
        %820 = vmatpush2.bf16.msra.mxu0 %v777
        %821 = vmatprep.subr.bf16.mxu0 0
        %822 = vmatpush2.bf16.msra.mxu0 %v776
        %823 = vmatprep.subr.bf16.mxu0 0
        %824 = vmatpush2.bf16.msra.mxu0 %v775
        %825 = vmatprep.subr.bf16.mxu0 0
        %826 = vmatpush2.bf16.msra.mxu0 %v774
        %827 = vmatprep.subr.bf16.mxu0 0
        %828 = vmatpush2.bf16.msra.mxu0 %v773
        %829 = vmatprep.mubr.bf16.mxu0 %v662
        %830 = vmatmul.mubr.bf16.gmra.mxu0 %v661
        %v831 = vpop.f32.mrf.mxu0
        %v832 = vadd.f32 %v699, %v831
        %v833 = vpop.f32.mrf.mxu0
        %v834 = vpop.f32.mrf.mxu0
        %v835 = vpop.f32.mrf.mxu0
        %836 = vdwg.mxu0
        %v837 = vmax.f32 %v654, 0.0
        %v838 = vpack.c.bf16 %v837, %v837
        %839 = vst [vmem:[#allocation2] sm:$0xf] %v838
        %v840 = vmax.f32 %v832, 0.0
        %v841 = vpack.c.bf16 %v840, %v840
        %842 = vst [vmem:[#allocation2 + $0x4] sm:$0xf] %v841
        %v843 = vld [vmem:[#allocation2] sm:$0xff]
        %v844 = vld [vmem:[#allocation11] sm:$0xff]
        %v845 = vld [vmem:[#allocation11 + $0x8] sm:$0xff]
        %v846 = vld [vmem:[#allocation11 + $0x10] sm:$0xff]
        %v847 = vld [vmem:[#allocation11 + $0x18] sm:$0xff]
        %v848 = vld [vmem:[#allocation11 + $0x20] sm:$0xff]
        %v849 = vld [vmem:[#allocation11 + $0x28] sm:$0xff]
        %v850 = vld [vmem:[#allocation11 + $0x30] sm:$0xff]
        %v851 = vld [vmem:[#allocation11 + $0x38] sm:$0xff]
        %v852 = vld [vmem:[#allocation11 + $0x40] sm:$0xff]
        %v853 = vld [vmem:[#allocation11 + $0x48] sm:$0xff]
        %v854 = vld [vmem:[#allocation11 + $0x50] sm:$0xff]
        %v855 = vld [vmem:[#allocation11 + $0x58] sm:$0xff]
        %v856 = vld [vmem:[#allocation11 + $0x60] sm:$0xff]
        %v857 = vld [vmem:[#allocation11 + $0x68] sm:$0xff]
        %v858 = vld [vmem:[#allocation11 + $0x70] sm:$0xff]
        %v859 = vld [vmem:[#allocation11 + $0x78] sm:$0xff]
        %v860 = vld [vmem:[#allocation11 + $0x80] sm:$0xff]
        %v861 = vld [vmem:[#allocation11 + $0x88] sm:$0xff]
        %v862 = vld [vmem:[#allocation11 + $0x90] sm:$0xff]
        %v863 = vld [vmem:[#allocation11 + $0x98] sm:$0xff]
        %v864 = vld [vmem:[#allocation11 + $0xa0] sm:$0xff]
        %v865 = vld [vmem:[#allocation11 + $0xa8] sm:$0xff]
        %v866 = vld [vmem:[#allocation11 + $0xb0] sm:$0xff]
        %v867 = vld [vmem:[#allocation11 + $0xb8] sm:$0xff]
        %v868 = vld [vmem:[#allocation11 + $0xc0] sm:$0xff]
        %v869 = vld [vmem:[#allocation11 + $0xc8] sm:$0xff]
        %v870 = vld [vmem:[#allocation11 + $0xd0] sm:$0xff]
        %v871 = vld [vmem:[#allocation11 + $0xd8] sm:$0xff]
        %v872 = vld [vmem:[#allocation11 + $0xe0] sm:$0xff]
        %v873 = vld [vmem:[#allocation11 + $0xe8] sm:$0xff]
        %v874 = vld [vmem:[#allocation11 + $0xf0] sm:$0xff]
        %v875 = vld [vmem:[#allocation11 + $0xf8] sm:$0xff]
        %v877 = vlaneseq
        %v878 = vshrl.u32 %v877, 7
        %v879 = vsub.s32 0, %v878
        %v880 = vrot.slane %v477, %v879
        %v881 = vlaneseq
        %v882 = vshrl.u32 %v881, 7
        %v883 = vsub.s32 1, %v882
        %v884 = vrot.slane %v477, %v883
        %v888 = vunpack.c.l.b16 %v843
        %v889 = vunpack.c.h.b16 %v843
        %v890 = vpack.c.b16 %v888, %v888
        %v891 = vpack.c.b16 %v889, %v889
        %v926 = vunpack.c.l.b16 %v844
        %v927 = vunpack.c.h.b16 %v844
        %v928 = vunpack.c.l.b16 %v845
        %v929 = vunpack.c.h.b16 %v845
        %v930 = vunpack.c.l.b16 %v846
        %v931 = vunpack.c.h.b16 %v846
        %v932 = vunpack.c.l.b16 %v847
        %v933 = vunpack.c.h.b16 %v847
        %v934 = vunpack.c.l.b16 %v848
        %v935 = vunpack.c.h.b16 %v848
        %v936 = vunpack.c.l.b16 %v849
        %v937 = vunpack.c.h.b16 %v849
        %v938 = vunpack.c.l.b16 %v850
        %v939 = vunpack.c.h.b16 %v850
        %v940 = vunpack.c.l.b16 %v851
        %v941 = vunpack.c.h.b16 %v851
        %v942 = vunpack.c.l.b16 %v852
        %v943 = vunpack.c.h.b16 %v852
        %v944 = vunpack.c.l.b16 %v853
        %v945 = vunpack.c.h.b16 %v853
        %v946 = vunpack.c.l.b16 %v854
        %v947 = vunpack.c.h.b16 %v854
        %v948 = vunpack.c.l.b16 %v855
        %v949 = vunpack.c.h.b16 %v855
        %v950 = vunpack.c.l.b16 %v856
        %v951 = vunpack.c.h.b16 %v856
        %v952 = vunpack.c.l.b16 %v857
        %v953 = vunpack.c.h.b16 %v857
        %v954 = vunpack.c.l.b16 %v858
        %v955 = vunpack.c.h.b16 %v858
        %v956 = vunpack.c.l.b16 %v859
        %v957 = vunpack.c.h.b16 %v859
        %v958 = vunpack.c.l.b16 %v860
        %v959 = vunpack.c.h.b16 %v860
        %v960 = vunpack.c.l.b16 %v861
        %v961 = vunpack.c.h.b16 %v861
        %v962 = vunpack.c.l.b16 %v862
        %v963 = vunpack.c.h.b16 %v862
        %v964 = vunpack.c.l.b16 %v863
        %v965 = vunpack.c.h.b16 %v863
        %v966 = vunpack.c.l.b16 %v864
        %v967 = vunpack.c.h.b16 %v864
        %v968 = vunpack.c.l.b16 %v865
        %v969 = vunpack.c.h.b16 %v865
        %v970 = vunpack.c.l.b16 %v866
        %v971 = vunpack.c.h.b16 %v866
        %v972 = vunpack.c.l.b16 %v867
        %v973 = vunpack.c.h.b16 %v867
        %v974 = vunpack.c.l.b16 %v868
        %v975 = vunpack.c.h.b16 %v868
        %v976 = vunpack.c.l.b16 %v869
        %v977 = vunpack.c.h.b16 %v869
        %v978 = vunpack.c.l.b16 %v870
        %v979 = vunpack.c.h.b16 %v870
        %v980 = vunpack.c.l.b16 %v871
        %v981 = vunpack.c.h.b16 %v871
        %v982 = vunpack.c.l.b16 %v872
        %v983 = vunpack.c.h.b16 %v872
        %v984 = vunpack.c.l.b16 %v873
        %v985 = vunpack.c.h.b16 %v873
        %v986 = vunpack.c.l.b16 %v874
        %v987 = vunpack.c.h.b16 %v874
        %v988 = vunpack.c.l.b16 %v875
        %v989 = vunpack.c.h.b16 %v875
        %v990 = vpack.c.b16 %v928, %v926
        %v991 = vpack.c.b16 %v929, %v927
        %v992 = vpack.c.b16 %v932, %v930
        %v993 = vpack.c.b16 %v933, %v931
        %v994 = vpack.c.b16 %v936, %v934
        %v995 = vpack.c.b16 %v937, %v935
        %v996 = vpack.c.b16 %v940, %v938
        %v997 = vpack.c.b16 %v941, %v939
        %v998 = vpack.c.b16 %v944, %v942
        %v999 = vpack.c.b16 %v945, %v943
        %v1000 = vpack.c.b16 %v948, %v946
        %v1001 = vpack.c.b16 %v949, %v947
        %v1002 = vpack.c.b16 %v952, %v950
        %v1003 = vpack.c.b16 %v953, %v951
        %v1004 = vpack.c.b16 %v956, %v954
        %v1005 = vpack.c.b16 %v957, %v955
        %v1006 = vpack.c.b16 %v960, %v958
        %v1007 = vpack.c.b16 %v961, %v959
        %v1008 = vpack.c.b16 %v964, %v962
        %v1009 = vpack.c.b16 %v965, %v963
        %v1010 = vpack.c.b16 %v968, %v966
        %v1011 = vpack.c.b16 %v969, %v967
        %v1012 = vpack.c.b16 %v972, %v970
        %v1013 = vpack.c.b16 %v973, %v971
        %v1014 = vpack.c.b16 %v976, %v974
        %v1015 = vpack.c.b16 %v977, %v975
        %v1016 = vpack.c.b16 %v980, %v978
        %v1017 = vpack.c.b16 %v981, %v979
        %v1018 = vpack.c.b16 %v984, %v982
        %v1019 = vpack.c.b16 %v985, %v983
        %v1020 = vpack.c.b16 %v988, %v986
        %v1021 = vpack.c.b16 %v989, %v987
        %1054 = vmatprep.subr.bf16.mxu0 %v1005
        %1055 = vmatpush1.bf16.msra.mxu0 %v1004
        %1056 = vmatprep.subr.bf16.mxu0 %v1003
        %1057 = vmatpush1.bf16.msra.mxu0 %v1002
        %1058 = vmatprep.subr.bf16.mxu0 %v1001
        %1059 = vmatpush1.bf16.msra.mxu0 %v1000
        %1060 = vmatprep.subr.bf16.mxu0 %v999
        %1061 = vmatpush1.bf16.msra.mxu0 %v998
        %1062 = vmatprep.subr.bf16.mxu0 %v997
        %1063 = vmatpush1.bf16.msra.mxu0 %v996
        %1064 = vmatprep.subr.bf16.mxu0 %v995
        %1065 = vmatpush1.bf16.msra.mxu0 %v994
        %1066 = vmatprep.subr.bf16.mxu0 %v993
        %1067 = vmatpush1.bf16.msra.mxu0 %v992
        %1068 = vmatprep.subr.bf16.mxu0 %v991
        %1069 = vmatpush1.bf16.msra.mxu0 %v990
        %1070 = vmatprep.subr.bf16.mxu0 %v1021
        %1071 = vmatpush2.bf16.msra.mxu0 %v1020
        %1072 = vmatprep.subr.bf16.mxu0 %v1019
        %1073 = vmatpush2.bf16.msra.mxu0 %v1018
        %1074 = vmatprep.subr.bf16.mxu0 %v1017
        %1075 = vmatpush2.bf16.msra.mxu0 %v1016
        %1076 = vmatprep.subr.bf16.mxu0 %v1015
        %1077 = vmatpush2.bf16.msra.mxu0 %v1014
        %1078 = vmatprep.subr.bf16.mxu0 %v1013
        %1079 = vmatpush2.bf16.msra.mxu0 %v1012
        %1080 = vmatprep.subr.bf16.mxu0 %v1011
        %1081 = vmatpush2.bf16.msra.mxu0 %v1010
        %1082 = vmatprep.subr.bf16.mxu0 %v1009
        %1083 = vmatpush2.bf16.msra.mxu0 %v1008
        %1084 = vmatprep.subr.bf16.mxu0 %v1007
        %1085 = vmatpush2.bf16.msra.mxu0 %v1006
        %1086 = vmatprep.mubr.bf16.mxu0 %v891
        %1087 = vmatmul.mubr.bf16.gmra.mxu0 %v890
        %v1088 = vpop.f32.mrf.mxu0
        %v1089 = vadd.f32 %v880, %v1088
        %v1090 = vpop.f32.mrf.mxu0
        %v1091 = vadd.f32 %v884, %v1090
        %v1092 = vpop.f32.mrf.mxu0
        %v1093 = vpop.f32.mrf.mxu0
        %1094 = vdwg.mxu0
        %v1095 = vmax.f32 %v1089, 0.0
        %v1096 = vmax.f32 %v1091, 0.0
        %v1097 = vpack.c.bf16 %v1095, %v1095
        %v1098 = vpack.c.bf16 %v1096, %v1096
        %v1099 = vld [vmem:[#allocation12] sm:$0xff]
        %v1100 = vld [vmem:[#allocation12 + $0x8] sm:$0xff]
        %v1101 = vld [vmem:[#allocation12 + $0x10] sm:$0xff]
        %v1102 = vld [vmem:[#allocation12 + $0x18] sm:$0xff]
        %v1103 = vld [vmem:[#allocation12 + $0x20] sm:$0xff]
        %v1104 = vld [vmem:[#allocation12 + $0x28] sm:$0xff]
        %v1105 = vld [vmem:[#allocation12 + $0x30] sm:$0xff]
        %v1106 = vld [vmem:[#allocation12 + $0x38] sm:$0xff]
        %v1107 = vld [vmem:[#allocation12 + $0x40] sm:$0xff]
        %v1108 = vld [vmem:[#allocation12 + $0x48] sm:$0xff]
        %v1109 = vld [vmem:[#allocation12 + $0x50] sm:$0xff]
        %v1110 = vld [vmem:[#allocation12 + $0x58] sm:$0xff]
        %v1111 = vld [vmem:[#allocation12 + $0x60] sm:$0xff]
        %v1112 = vld [vmem:[#allocation12 + $0x68] sm:$0xff]
        %v1113 = vld [vmem:[#allocation12 + $0x70] sm:$0xff]
        %v1114 = vld [vmem:[#allocation12 + $0x78] sm:$0xff]
        %v1115 = vld [vmem:[#allocation12 + $0x80] sm:$0xff]
        %v1116 = vld [vmem:[#allocation12 + $0x88] sm:$0xff]
        %v1117 = vld [vmem:[#allocation12 + $0x90] sm:$0xff]
        %v1118 = vld [vmem:[#allocation12 + $0x98] sm:$0xff]
        %v1119 = vld [vmem:[#allocation12 + $0xa0] sm:$0xff]
        %v1120 = vld [vmem:[#allocation12 + $0xa8] sm:$0xff]
        %v1121 = vld [vmem:[#allocation12 + $0xb0] sm:$0xff]
        %v1122 = vld [vmem:[#allocation12 + $0xb8] sm:$0xff]
        %v1123 = vld [vmem:[#allocation12 + $0xc0] sm:$0xff]
        %v1124 = vld [vmem:[#allocation12 + $0xc8] sm:$0xff]
        %v1125 = vld [vmem:[#allocation12 + $0xd0] sm:$0xff]
        %v1126 = vld [vmem:[#allocation12 + $0xd8] sm:$0xff]
        %v1127 = vld [vmem:[#allocation12 + $0xe0] sm:$0xff]
        %v1128 = vld [vmem:[#allocation12 + $0xe8] sm:$0xff]
        %v1129 = vld [vmem:[#allocation12 + $0xf0] sm:$0xff]
        %v1130 = vld [vmem:[#allocation12 + $0xf8] sm:$0xff]
        %v1132 = vlaneseq
        %v1133 = vshrl.u32 %v1132, 7
        %v1134 = vsub.s32 0, %v1133
        %v1135 = vrot.slane %v478, %v1134
        %v1136 = vlaneseq
        %v1137 = vshrl.u32 %v1136, 7
        %v1138 = vsub.s32 1, %v1137
        %v1139 = vrot.slane %v478, %v1138
        %v1174 = vunpack.c.l.b16 %v1099
        %v1175 = vunpack.c.h.b16 %v1099
        %v1176 = vunpack.c.l.b16 %v1100
        %v1177 = vunpack.c.h.b16 %v1100
        %v1178 = vunpack.c.l.b16 %v1101
        %v1179 = vunpack.c.h.b16 %v1101
        %v1180 = vunpack.c.l.b16 %v1102
        %v1181 = vunpack.c.h.b16 %v1102
        %v1182 = vunpack.c.l.b16 %v1103
        %v1183 = vunpack.c.h.b16 %v1103
        %v1184 = vunpack.c.l.b16 %v1104
        %v1185 = vunpack.c.h.b16 %v1104
        %v1186 = vunpack.c.l.b16 %v1105
        %v1187 = vunpack.c.h.b16 %v1105
        %v1188 = vunpack.c.l.b16 %v1106
        %v1189 = vunpack.c.h.b16 %v1106
        %v1190 = vunpack.c.l.b16 %v1107
        %v1191 = vunpack.c.h.b16 %v1107
        %v1192 = vunpack.c.l.b16 %v1108
        %v1193 = vunpack.c.h.b16 %v1108
        %v1194 = vunpack.c.l.b16 %v1109
        %v1195 = vunpack.c.h.b16 %v1109
        %v1196 = vunpack.c.l.b16 %v1110
        %v1197 = vunpack.c.h.b16 %v1110
        %v1198 = vunpack.c.l.b16 %v1111
        %v1199 = vunpack.c.h.b16 %v1111
        %v1200 = vunpack.c.l.b16 %v1112
        %v1201 = vunpack.c.h.b16 %v1112
        %v1202 = vunpack.c.l.b16 %v1113
        %v1203 = vunpack.c.h.b16 %v1113
        %v1204 = vunpack.c.l.b16 %v1114
        %v1205 = vunpack.c.h.b16 %v1114
        %v1206 = vunpack.c.l.b16 %v1115
        %v1207 = vunpack.c.h.b16 %v1115
        %v1208 = vunpack.c.l.b16 %v1116
        %v1209 = vunpack.c.h.b16 %v1116
        %v1210 = vunpack.c.l.b16 %v1117
        %v1211 = vunpack.c.h.b16 %v1117
        %v1212 = vunpack.c.l.b16 %v1118
        %v1213 = vunpack.c.h.b16 %v1118
        %v1214 = vunpack.c.l.b16 %v1119
        %v1215 = vunpack.c.h.b16 %v1119
        %v1216 = vunpack.c.l.b16 %v1120
        %v1217 = vunpack.c.h.b16 %v1120
        %v1218 = vunpack.c.l.b16 %v1121
        %v1219 = vunpack.c.h.b16 %v1121
        %v1220 = vunpack.c.l.b16 %v1122
        %v1221 = vunpack.c.h.b16 %v1122
        %v1222 = vunpack.c.l.b16 %v1123
        %v1223 = vunpack.c.h.b16 %v1123
        %v1224 = vunpack.c.l.b16 %v1124
        %v1225 = vunpack.c.h.b16 %v1124
        %v1226 = vunpack.c.l.b16 %v1125
        %v1227 = vunpack.c.h.b16 %v1125
        %v1228 = vunpack.c.l.b16 %v1126
        %v1229 = vunpack.c.h.b16 %v1126
        %v1230 = vunpack.c.l.b16 %v1127
        %v1231 = vunpack.c.h.b16 %v1127
        %v1232 = vunpack.c.l.b16 %v1128
        %v1233 = vunpack.c.h.b16 %v1128
        %v1234 = vunpack.c.l.b16 %v1129
        %v1235 = vunpack.c.h.b16 %v1129
        %v1236 = vunpack.c.l.b16 %v1130
        %v1237 = vunpack.c.h.b16 %v1130
        %v1238 = vpack.c.b16 %v1176, %v1174
        %v1239 = vpack.c.b16 %v1177, %v1175
        %v1240 = vpack.c.b16 %v1180, %v1178
        %v1241 = vpack.c.b16 %v1181, %v1179
        %v1242 = vpack.c.b16 %v1184, %v1182
        %v1243 = vpack.c.b16 %v1185, %v1183
        %v1244 = vpack.c.b16 %v1188, %v1186
        %v1245 = vpack.c.b16 %v1189, %v1187
        %v1246 = vpack.c.b16 %v1192, %v1190
        %v1247 = vpack.c.b16 %v1193, %v1191
        %v1248 = vpack.c.b16 %v1196, %v1194
        %v1249 = vpack.c.b16 %v1197, %v1195
        %v1250 = vpack.c.b16 %v1200, %v1198
        %v1251 = vpack.c.b16 %v1201, %v1199
        %v1252 = vpack.c.b16 %v1204, %v1202
        %v1253 = vpack.c.b16 %v1205, %v1203
        %v1254 = vpack.c.b16 %v1208, %v1206
        %v1255 = vpack.c.b16 %v1209, %v1207
        %v1256 = vpack.c.b16 %v1212, %v1210
        %v1257 = vpack.c.b16 %v1213, %v1211
        %v1258 = vpack.c.b16 %v1216, %v1214
        %v1259 = vpack.c.b16 %v1217, %v1215
        %v1260 = vpack.c.b16 %v1220, %v1218
        %v1261 = vpack.c.b16 %v1221, %v1219
        %v1262 = vpack.c.b16 %v1224, %v1222
        %v1263 = vpack.c.b16 %v1225, %v1223
        %v1264 = vpack.c.b16 %v1228, %v1226
        %v1265 = vpack.c.b16 %v1229, %v1227
        %v1266 = vpack.c.b16 %v1232, %v1230
        %v1267 = vpack.c.b16 %v1233, %v1231
        %v1268 = vpack.c.b16 %v1236, %v1234
        %v1269 = vpack.c.b16 %v1237, %v1235
        %1302 = vmatprep.subr.bf16.mxu0 %v1253
        %1303 = vmatpush1.bf16.msra.mxu0 %v1252
        %1304 = vmatprep.subr.bf16.mxu0 %v1251
        %1305 = vmatpush1.bf16.msra.mxu0 %v1250
        %1306 = vmatprep.subr.bf16.mxu0 %v1249
        %1307 = vmatpush1.bf16.msra.mxu0 %v1248
        %1308 = vmatprep.subr.bf16.mxu0 %v1247
        %1309 = vmatpush1.bf16.msra.mxu0 %v1246
        %1310 = vmatprep.subr.bf16.mxu0 %v1245
        %1311 = vmatpush1.bf16.msra.mxu0 %v1244
        %1312 = vmatprep.subr.bf16.mxu0 %v1243
        %1313 = vmatpush1.bf16.msra.mxu0 %v1242
        %1314 = vmatprep.subr.bf16.mxu0 %v1241
        %1315 = vmatpush1.bf16.msra.mxu0 %v1240
        %1316 = vmatprep.subr.bf16.mxu0 %v1239
        %1317 = vmatpush1.bf16.msra.mxu0 %v1238
        %1318 = vmatprep.subr.bf16.mxu0 %v1269
        %1319 = vmatpush2.bf16.msra.mxu0 %v1268
        %1320 = vmatprep.subr.bf16.mxu0 %v1267
        %1321 = vmatpush2.bf16.msra.mxu0 %v1266
        %1322 = vmatprep.subr.bf16.mxu0 %v1265
        %1323 = vmatpush2.bf16.msra.mxu0 %v1264
        %1324 = vmatprep.subr.bf16.mxu0 %v1263
        %1325 = vmatpush2.bf16.msra.mxu0 %v1262
        %1326 = vmatprep.subr.bf16.mxu0 %v1261
        %1327 = vmatpush2.bf16.msra.mxu0 %v1260
        %1328 = vmatprep.subr.bf16.mxu0 %v1259
        %1329 = vmatpush2.bf16.msra.mxu0 %v1258
        %1330 = vmatprep.subr.bf16.mxu0 %v1257
        %1331 = vmatpush2.bf16.msra.mxu0 %v1256
        %1332 = vmatprep.subr.bf16.mxu0 %v1255
        %1333 = vmatpush2.bf16.msra.mxu0 %v1254
        %1334 = vmatprep.mubr.bf16.mxu0 %v1098
        %1335 = vmatmul.mubr.bf16.gmra.mxu0 %v1097
        %v1336 = vpop.f32.mrf.mxu0
        %v1337 = vadd.f32 %v1135, %v1336
        %v1338 = vpop.f32.mrf.mxu0
        %v1339 = vadd.f32 %v1139, %v1338
        %v1340 = vpop.f32.mrf.mxu0
        %v1341 = vpop.f32.mrf.mxu0
        %1342 = vdwg.mxu0
        %v1343 = vmax.f32 %v1337, 0.0
        %v1344 = vmax.f32 %v1339, 0.0
        %v1345 = vpack.c.bf16 %v1343, %v1343
        %v1346 = vpack.c.bf16 %v1344, %v1344
        %v1347 = vld [vmem:[#allocation14] sm:$0xf]
        %v1348 = vld [vmem:[#allocation14 + $0x4] sm:$0xf]
        %v1349 = vld [vmem:[#allocation14 + $0x8] sm:$0xf]
        %v1350 = vld [vmem:[#allocation14 + $0xc] sm:$0xf]
        %v1351 = vld [vmem:[#allocation14 + $0x10] sm:$0xf]
        %v1352 = vld [vmem:[#allocation14 + $0x14] sm:$0xf]
        %v1353 = vld [vmem:[#allocation14 + $0x18] sm:$0xf]
        %v1354 = vld [vmem:[#allocation14 + $0x1c] sm:$0xf]
        %v1355 = vld [vmem:[#allocation14 + $0x20] sm:$0xf]
        %v1356 = vld [vmem:[#allocation14 + $0x24] sm:$0xf]
        %v1357 = vld [vmem:[#allocation14 + $0x28] sm:$0xf]
        %v1358 = vld [vmem:[#allocation14 + $0x2c] sm:$0xf]
        %v1359 = vld [vmem:[#allocation14 + $0x30] sm:$0xf]
        %v1360 = vld [vmem:[#allocation14 + $0x34] sm:$0xf]
        %v1361 = vld [vmem:[#allocation14 + $0x38] sm:$0xf]
        %v1362 = vld [vmem:[#allocation14 + $0x3c] sm:$0xf]
        %v1363 = vld [vmem:[#allocation14 + $0x40] sm:$0xf]
        %v1364 = vld [vmem:[#allocation14 + $0x44] sm:$0xf]
        %v1365 = vld [vmem:[#allocation14 + $0x48] sm:$0xf]
        %v1366 = vld [vmem:[#allocation14 + $0x4c] sm:$0xf]
        %v1367 = vld [vmem:[#allocation14 + $0x50] sm:$0xf]
        %v1368 = vld [vmem:[#allocation14 + $0x54] sm:$0xf]
        %v1369 = vld [vmem:[#allocation14 + $0x58] sm:$0xf]
        %v1370 = vld [vmem:[#allocation14 + $0x5c] sm:$0xf]
        %v1371 = vld [vmem:[#allocation14 + $0x60] sm:$0xf]
        %v1372 = vld [vmem:[#allocation14 + $0x64] sm:$0xf]
        %v1373 = vld [vmem:[#allocation14 + $0x68] sm:$0xf]
        %v1374 = vld [vmem:[#allocation14 + $0x6c] sm:$0xf]
        %v1375 = vld [vmem:[#allocation14 + $0x70] sm:$0xf]
        %v1376 = vld [vmem:[#allocation14 + $0x74] sm:$0xf]
        %v1377 = vld [vmem:[#allocation14 + $0x78] sm:$0xf]
        %v1378 = vld [vmem:[#allocation14 + $0x7c] sm:$0xf]
        %v1380 = vlaneseq
        %v1381 = vshrl.u32 %v1380, 7
        %v1382 = vsub.s32 0, %v1381
        %v1383 = vrot.slane %v479, %v1382
        %v1417 = vunpack.c.l.b16 %v1347
        %v1418 = vunpack.c.l.b16 %v1348
        %v1419 = vunpack.c.l.b16 %v1349
        %v1420 = vunpack.c.l.b16 %v1350
        %v1421 = vunpack.c.l.b16 %v1351
        %v1422 = vunpack.c.l.b16 %v1352
        %v1423 = vunpack.c.l.b16 %v1353
        %v1424 = vunpack.c.l.b16 %v1354
        %v1425 = vunpack.c.l.b16 %v1355
        %v1426 = vunpack.c.l.b16 %v1356
        %v1427 = vunpack.c.l.b16 %v1357
        %v1428 = vunpack.c.l.b16 %v1358
        %v1429 = vunpack.c.l.b16 %v1359
        %v1430 = vunpack.c.l.b16 %v1360
        %v1431 = vunpack.c.l.b16 %v1361
        %v1432 = vunpack.c.l.b16 %v1362
        %v1433 = vunpack.c.l.b16 %v1363
        %v1434 = vunpack.c.l.b16 %v1364
        %v1435 = vunpack.c.l.b16 %v1365
        %v1436 = vunpack.c.l.b16 %v1366
        %v1437 = vunpack.c.l.b16 %v1367
        %v1438 = vunpack.c.l.b16 %v1368
        %v1439 = vunpack.c.l.b16 %v1369
        %v1440 = vunpack.c.l.b16 %v1370
        %v1441 = vunpack.c.l.b16 %v1371
        %v1442 = vunpack.c.l.b16 %v1372
        %v1443 = vunpack.c.l.b16 %v1373
        %v1444 = vunpack.c.l.b16 %v1374
        %v1445 = vunpack.c.l.b16 %v1375
        %v1446 = vunpack.c.l.b16 %v1376
        %v1447 = vunpack.c.l.b16 %v1377
        %v1448 = vunpack.c.l.b16 %v1378
        %v1449 = vpack.c.b16 %v1418, %v1417
        %v1450 = vpack.c.b16 %v1420, %v1419
        %v1451 = vpack.c.b16 %v1422, %v1421
        %v1452 = vpack.c.b16 %v1424, %v1423
        %v1453 = vpack.c.b16 %v1426, %v1425
        %v1454 = vpack.c.b16 %v1428, %v1427
        %v1455 = vpack.c.b16 %v1430, %v1429
        %v1456 = vpack.c.b16 %v1432, %v1431
        %v1457 = vpack.c.b16 %v1434, %v1433
        %v1458 = vpack.c.b16 %v1436, %v1435
        %v1459 = vpack.c.b16 %v1438, %v1437
        %v1460 = vpack.c.b16 %v1440, %v1439
        %v1461 = vpack.c.b16 %v1442, %v1441
        %v1462 = vpack.c.b16 %v1444, %v1443
        %v1463 = vpack.c.b16 %v1446, %v1445
        %v1464 = vpack.c.b16 %v1448, %v1447
        %1481 = vmatprep.subr.bf16.mxu0 0
        %1482 = vmatpush1.bf16.msra.mxu0 %v1456
        %1483 = vmatprep.subr.bf16.mxu0 0
        %1484 = vmatpush1.bf16.msra.mxu0 %v1455
        %1485 = vmatprep.subr.bf16.mxu0 0
        %1486 = vmatpush1.bf16.msra.mxu0 %v1454
        %1487 = vmatprep.subr.bf16.mxu0 0
        %1488 = vmatpush1.bf16.msra.mxu0 %v1453
        %1489 = vmatprep.subr.bf16.mxu0 0
        %1490 = vmatpush1.bf16.msra.mxu0 %v1452
        %1491 = vmatprep.subr.bf16.mxu0 0
        %1492 = vmatpush1.bf16.msra.mxu0 %v1451
        %1493 = vmatprep.subr.bf16.mxu0 0
        %1494 = vmatpush1.bf16.msra.mxu0 %v1450
        %1495 = vmatprep.subr.bf16.mxu0 0
        %1496 = vmatpush1.bf16.msra.mxu0 %v1449
        %1497 = vmatprep.subr.bf16.mxu0 0
        %1498 = vmatpush2.bf16.msra.mxu0 %v1464
        %1499 = vmatprep.subr.bf16.mxu0 0
        %1500 = vmatpush2.bf16.msra.mxu0 %v1463
        %1501 = vmatprep.subr.bf16.mxu0 0
        %1502 = vmatpush2.bf16.msra.mxu0 %v1462
        %1503 = vmatprep.subr.bf16.mxu0 0
        %1504 = vmatpush2.bf16.msra.mxu0 %v1461
        %1505 = vmatprep.subr.bf16.mxu0 0
        %1506 = vmatpush2.bf16.msra.mxu0 %v1460
        %1507 = vmatprep.subr.bf16.mxu0 0
        %1508 = vmatpush2.bf16.msra.mxu0 %v1459
        %1509 = vmatprep.subr.bf16.mxu0 0
        %1510 = vmatpush2.bf16.msra.mxu0 %v1458
        %1511 = vmatprep.subr.bf16.mxu0 0
        %1512 = vmatpush2.bf16.msra.mxu0 %v1457
        %1513 = vmatprep.mubr.bf16.mxu0 %v1346
        %1514 = vmatmul.mubr.bf16.gmra.mxu0 %v1345
        %v1515 = vpop.f32.mrf.mxu0
        %v1516 = vadd.f32 %v1383, %v1515
        %v1517 = vpop.f32.mrf.mxu0
        %v1518 = vpop.f32.mrf.mxu0
        %v1519 = vpop.f32.mrf.mxu0
        %1520 = vdwg.mxu0
        %v1521 = vmax.f32 %v1516, 0.0
        %v1522 = vpack.c.bf16 %v1521, %v1521
        %v1523 = vld [vmem:[#allocation15] sm:$0xf]
        %v1524 = vld [vmem:[#allocation15 + $0x4] sm:$0xf]
        %v1525 = vld [vmem:[#allocation15 + $0x8] sm:$0xf]
        %v1526 = vld [vmem:[#allocation15 + $0xc] sm:$0xf]
        %v1527 = vld [vmem:[#allocation15 + $0x10] sm:$0xf]
        %v1528 = vld [vmem:[#allocation15 + $0x14] sm:$0xf]
        %v1529 = vld [vmem:[#allocation15 + $0x18] sm:$0xf]
        %v1530 = vld [vmem:[#allocation15 + $0x1c] sm:$0xf]
        %v1531 = vld [vmem:[#allocation15 + $0x20] sm:$0xf]
        %v1532 = vld [vmem:[#allocation15 + $0x24] sm:$0xf]
        %v1533 = vld [vmem:[#allocation15 + $0x28] sm:$0xf]
        %v1534 = vld [vmem:[#allocation15 + $0x2c] sm:$0xf]
        %v1535 = vld [vmem:[#allocation15 + $0x30] sm:$0xf]
        %v1536 = vld [vmem:[#allocation15 + $0x34] sm:$0xf]
        %v1537 = vld [vmem:[#allocation15 + $0x38] sm:$0xf]
        %v1538 = vld [vmem:[#allocation15 + $0x3c] sm:$0xf]
        %v1540 = vlaneseq
        %v1541 = vshrl.u32 %v1540, 7
        %v1542 = vsub.s32 0, %v1541
        %v1543 = vrot.slane %v480, %v1542
        %v1561 = vunpack.c.l.b16 %v1523
        %v1562 = vunpack.c.l.b16 %v1524
        %v1563 = vunpack.c.l.b16 %v1525
        %v1564 = vunpack.c.l.b16 %v1526
        %v1565 = vunpack.c.l.b16 %v1527
        %v1566 = vunpack.c.l.b16 %v1528
        %v1567 = vunpack.c.l.b16 %v1529
        %v1568 = vunpack.c.l.b16 %v1530
        %v1569 = vunpack.c.l.b16 %v1531
        %v1570 = vunpack.c.l.b16 %v1532
        %v1571 = vunpack.c.l.b16 %v1533
        %v1572 = vunpack.c.l.b16 %v1534
        %v1573 = vunpack.c.l.b16 %v1535
        %v1574 = vunpack.c.l.b16 %v1536
        %v1575 = vunpack.c.l.b16 %v1537
        %v1576 = vunpack.c.l.b16 %v1538
        %v1577 = vpack.c.b16 %v1562, %v1561
        %v1578 = vpack.c.b16 %v1564, %v1563
        %v1579 = vpack.c.b16 %v1566, %v1565
        %v1580 = vpack.c.b16 %v1568, %v1567
        %v1581 = vpack.c.b16 %v1570, %v1569
        %v1582 = vpack.c.b16 %v1572, %v1571
        %v1583 = vpack.c.b16 %v1574, %v1573
        %v1584 = vpack.c.b16 %v1576, %v1575
        %1593 = vmatprep.subr.bf16.mxu0 0
        %1594 = vmatpush1.bf16.msra.mxu0 %v1584
        %1595 = vmatprep.subr.bf16.mxu0 0
        %1596 = vmatpush1.bf16.msra.mxu0 %v1583
        %1597 = vmatprep.subr.bf16.mxu0 0
        %1598 = vmatpush1.bf16.msra.mxu0 %v1582
        %1599 = vmatprep.subr.bf16.mxu0 0
        %1600 = vmatpush1.bf16.msra.mxu0 %v1581
        %1601 = vmatprep.subr.bf16.mxu0 0
        %1602 = vmatpush1.bf16.msra.mxu0 %v1580
        %1603 = vmatprep.subr.bf16.mxu0 0
        %1604 = vmatpush1.bf16.msra.mxu0 %v1579
        %1605 = vmatprep.subr.bf16.mxu0 0
        %1606 = vmatpush1.bf16.msra.mxu0 %v1578
        %1607 = vmatprep.subr.bf16.mxu0 0
        %1608 = vmatpush1.bf16.msra.mxu0 %v1577
        %1609 = vmatprep.subr.bf16.mxu0 0
        %1610 = vmatpush2.bf16.msra.mxu0 0
        %1611 = vmatprep.subr.bf16.mxu0 0
        %1612 = vmatpush2.bf16.msra.mxu0 0
        %1613 = vmatprep.subr.bf16.mxu0 0
        %1614 = vmatpush2.bf16.msra.mxu0 0
        %1615 = vmatprep.subr.bf16.mxu0 0
        %1616 = vmatpush2.bf16.msra.mxu0 0
        %1617 = vmatprep.subr.bf16.mxu0 0
        %1618 = vmatpush2.bf16.msra.mxu0 0
        %1619 = vmatprep.subr.bf16.mxu0 0
        %1620 = vmatpush2.bf16.msra.mxu0 0
        %1621 = vmatprep.subr.bf16.mxu0 0
        %1622 = vmatpush2.bf16.msra.mxu0 0
        %1623 = vmatprep.subr.bf16.mxu0 0
        %1624 = vmatpush2.bf16.msra.mxu0 0
        %1625 = vmatprep.mubr.bf16.mxu0 0
        %1626 = vmatmul.mubr.bf16.gmra.mxu0 %v1522
        %v1627 = vpop.f32.mrf.mxu0
        %v1628 = vadd.f32 %v1543, %v1627
        %v1629 = vpop.f32.mrf.mxu0
        %v1630 = vpop.f32.mrf.mxu0
        %v1631 = vpop.f32.mrf.mxu0
        %1632 = vdwg.mxu0
        %v1633 = vpack.c.bf16 %v1628, %v1628
        %1634 = vst [vmem:[%s473] sm:$0xf] %v1633
        %s1635 = sand.u32 %s239, 1
        %s1636 = scalar_lea.sflag [#allocation5], %s1635
        %s1637 = sand.u32 %s239, 1
        %s1638 = smul.addr %s1637, 4
        %s1639 = scalar_lea.vmem [#allocation17], %s1638
        // Predicated region
        $region89: #{tpu_custom_call.1} parent=55 // pred_check
          %p1640 = pneg %p249
        $region90: #{tpu_custom_call.1} parent=55 // pred_check_branch
          %1642 = sbr.rel (%p1640) target = $region92
        $region91: #{tpu_custom_call.1} parent=55 // pred_region
          %s1644 = ssub.s32 64, 64
          %1645 = vsyncadd %s1636, %s1644
          %s1646 = smul.addr %s32, 64
          %s1647 = scalar_lea.hbm %s9, %s1646
          %s1649 = sshll.u32 %s1639, 4
          %s1650 = int_to_ptr.vmem [resolvable:$true] %s1649
          %1652 = dma.vmem_to_hbm [thread:$0]  %s1650, 64, %s1647, %s1636
        $region92: #{tpu_custom_call.1} parent=55 // pred_fallthru
          _
      $region56: #{tpu_custom_call.1} parent=5 // pred_fallthru
        _
      %p1653 = scmp.le.s32.totalorder 2, %s27
      // Predicated region
      $region93: #{tpu_custom_call.1} parent=5 // pred_check
        %p1654 = pneg %p1653
      $region94: #{tpu_custom_call.1} parent=5 // pred_check_branch
        %1656 = sbr.rel (%p1654) target = $region96
      $region95: #{tpu_custom_call.1} parent=5 // pred_region
        %s1657 = ssub.s32 %s27, 2
        // Predicated region
        $region97: #{tpu_custom_call.1} parent=95 // pred_check
          %p1658 = pneg %p255
        $region98: #{tpu_custom_call.1} parent=95 // pred_check_branch
          %1660 = sbr.rel (%p1658) target = $region100
        $region99: #{tpu_custom_call.1} parent=95 // pred_region
          %s1661 = sand.u32 %s240, 1
          %s1662 = scalar_lea.sflag [#allocation5], %s1661
          %s1663 = sand.u32 %s240, 1
          %s1664 = smul.addr %s1663, 4
          %s1665 = scalar_lea.vmem [#allocation17], %s1664
          %1666 = dma.done %s1662, 64
        $region100: #{tpu_custom_call.1} parent=95 // pred_fallthru
          _
      $region96: #{tpu_custom_call.1} parent=5 // pred_fallthru
        _
    $region6: #{tpu_custom_call.1} parent=1 // loop_footer
      %s31 = sadd.s32 1, %s27
    $region7: #{tpu_custom_call.1} parent=1 // loop_footer_branch
      %26 = sbr.rel target = $region3
    $region8: #{tpu_custom_call.1} parent=1 // loop_exit
      _
    %1667 = vsyncpa [#allocation4], 1
    %s1668 = scalar_lea.sflag [#allocation4], 1
    %1669 = vsyncpa %s1668, 1
    %1670 = vsyncpa [#allocation7], 1
    %s1671 = scalar_lea.sflag [#allocation7], 1
    %1672 = vsyncpa %s1671, 1
    %1673 = vsyncpa [#allocation10], 1
    %1674 = vsyncpa [#allocation13], 1
    %1675 = vsyncpa [#allocation16], 1
    %1676 = vsyncpa [#allocation5], 1
    %s1677 = scalar_lea.sflag [#allocation5], 1
    %1678 = vsyncpa %s1677, 1

</llo_original>
